<compile_context>
chip_gen: v5e
topology: v5e:2x2
jax: 0.10.0
libtpu: 0.0.40
codegen_flags: <defaults>
</compile_context>

<pallas_src>
import functools

import jax
import jax.numpy as jnp
from jax.experimental import pallas as pl
from jax.experimental.pallas import tpu as pltpu


def linear_attention_kernel(x_ref, wqkv_ref, wout_ref, bout_ref,
                            gamma_ref, beta_ref, mask_ref, o_ref,
                            *, heads, dim_head, scale, eps):
    Hd = heads * dim_head
    # Load at native dtype, cast to bf16 on the VPU (free; no wrapper pass).
    x = x_ref[0].astype(jnp.bfloat16)                    # (C, N)
    n = x.shape[-1]

    # to_qkv: 1x1 conv (no bias) == channel matmul, channel-major.
    qkv = jnp.dot(wqkv_ref[...], x,
                  preferred_element_type=jnp.float32)    # (3*Hd, N) f32
    q_all = qkv[0:Hd]                                    # (Hd, N) f32
    k_all = qkv[Hd:2 * Hd]                               # (Hd, N) f32
    # v is only ever a matmul operand -> keep it bf16 from the start.
    v_all = qkv[2 * Hd:3 * Hd].astype(jnp.bfloat16)      # (Hd, N) bf16

    # q: softmax over the d channels inside each head (torch dim=-2); the
    # `* scale` is folded into the (heads, 1, N) reciprocal.
    qh = q_all.reshape(heads, dim_head, n)
    q_max = jnp.max(qh, axis=1, keepdims=True)
    q_exp = jnp.exp(qh - q_max)
    q_inv = pl.reciprocal(jnp.sum(q_exp, axis=1, keepdims=True),
                          approx=True) * scale
    q_soft = (q_exp * q_inv).reshape(Hd, n).astype(jnp.bfloat16)   # (Hd, N)

    # k: softmax over tokens (torch dim=-1).
    k_max = jnp.max(k_all, axis=-1, keepdims=True)
    k_exp = jnp.exp(k_all - k_max)
    k_inv = pl.reciprocal(jnp.sum(k_exp, axis=-1, keepdims=True), approx=True)
    k_soft = (k_exp * k_inv).astype(jnp.bfloat16)                  # (Hd, N)

    # Fused-heads context, swapped operands: context^T[e, d] = sum_n v[e,n]*k[d,n].
    # Cross-head 32x32 blocks are zeroed with the precomputed 0/1 mask.
    context_t = jax.lax.dot_general(
        v_all, k_soft, (((1,), (1,)), ((), ())),
        preferred_element_type=jnp.float32)              # (Hd_e, Hd_d) f32
    context_t = context_t * mask_ref[...]

    # out[e, n] = sum_d context^T[e, d] * q[d, n]  -- MXU-native contraction.
    out = jnp.dot(context_t.astype(jnp.bfloat16), q_soft,
                  preferred_element_type=jnp.float32)    # (Hd, N) f32

    # to_out[0]: 1x1 conv with bias.
    y = jnp.dot(wout_ref[...], out.astype(jnp.bfloat16),
                preferred_element_type=jnp.float32)      # (C, N)
    y = y + bout_ref[...]                                # bias broadcast over N

    # to_out[1]: GroupNorm(1, dim) -- per-sample stats over (C, N), two-pass
    # (mean, then centered sum of squares) for numerical safety.
    inv_count = 1.0 / (y.shape[0] * y.shape[1])
    mean = jnp.sum(y, keepdims=True) * inv_count         # (1, 1)
    yc = y - mean
    var = jnp.sum(yc * yc, keepdims=True) * inv_count    # (1, 1)
    y = yc * jax.lax.rsqrt(var + eps)
    y = y * gamma_ref[...] + beta_ref[...]

    o_ref[0] = y.astype(o_ref.dtype)                     # lane-dense store


@functools.lru_cache(maxsize=None)
def _head_mask(heads, dim_head):
    """(Hd, Hd) 0/1 block-diagonal head mask, built once per (heads, dim_head)."""
    Hd = heads * dim_head
    hid = jnp.arange(Hd, dtype=jnp.int32) // dim_head
    return (hid[:, None] == hid[None, :]).astype(jnp.float32)


def _default_vmem_limit():
    """Generation-aware scoped-VMEM limit (~3/4 of physical, capped at 100 MiB)."""
    cap = 128 * 1024 * 1024
    try:
        info = pltpu.get_tpu_info()
        cap = int(getattr(info, "vmem_capacity_bytes", cap)) or cap
    except Exception:  # pragma: no cover - conservative fallback off-TPU
        pass
    return min((cap * 3) // 4, 100 * 1024 * 1024)


def prepare_linear_attention_params(params, dim):
    """Cast / reshape module params once at setup (not per forward call)."""
    return {
        "wqkv": jnp.asarray(params["wqkv"], jnp.bfloat16).reshape(-1, dim),
        "wout": jnp.asarray(params["wout"], jnp.bfloat16).reshape(dim, -1),
        "bout": jnp.asarray(params["bout"], jnp.float32).reshape(dim, 1),
        "gamma": jnp.asarray(params["gamma"], jnp.float32).reshape(dim, 1),
        "beta": jnp.asarray(params["beta"], jnp.float32).reshape(dim, 1),
    }


def linear_attention(x_nchw, params, *, heads=4, dim_head=32, eps=1e-5,
                     out_dtype=None, vmem_limit_bytes=None):
    b, c, h, w = x_nchw.shape
    n = h * w
    Hd = heads * dim_head
    scale = dim_head ** (-0.5)
    out_dtype = x_nchw.dtype if out_dtype is None else out_dtype
    if vmem_limit_bytes is None:
        vmem_limit_bytes = _default_vmem_limit()

    # Auto-prepare if raw PyTorch-layout params were passed.
    if params["wqkv"].dtype != jnp.bfloat16 or params["bout"].ndim != 2:
        params = prepare_linear_attention_params(params, c)

    # NCHW -> (B, C, N) is a pure reshape: no transpose, no extra HBM pass.
    # NOTE: no dtype cast here -- the kernel reads the native dtype directly.
    x = x_nchw.reshape(b, c, n)
    mask = _head_mask(heads, dim_head)

    # Rough per-grid-step VMEM budget: double-buffered IO blocks, weights, and
    # the f32/bf16 attention intermediates. Assert fit before launching.
    bx = jnp.dtype(x.dtype).itemsize
    bo = jnp.dtype(out_dtype).itemsize
    est_vmem = (2 * c * n * bx + 2 * c * n * bo               # x / out blocks (x2 buf)
                + 3 * Hd * c * 2 + c * Hd * 2 + 3 * c * 4     # weights + vecs
                + Hd * Hd * 4                                 # head mask
                + 32 * Hd * n                                 # qkv f32 + exps + bf16 copies + out
                + 3 * c * n * 4                               # y / centered y
                + 2 * Hd * Hd * 4)                            # context / masked copy
    assert est_vmem < vmem_limit_bytes, (
        f"per-step VMEM estimate {est_vmem} exceeds {vmem_limit_bytes}; "
        "add N-tiling (streaming k-softmax / two-pass GroupNorm) for this resolution")
    # TODO(synk): implement the N-tiled streaming variant (and a second
    # 'parallel' grid axis / 2-sample 256-wide MXU fusion) for N >= ~8K maps
    # and batch-1 v7x sampling.

    kernel = functools.partial(
        linear_attention_kernel,
        heads=heads, dim_head=dim_head, scale=scale, eps=eps)

    out = pl.pallas_call(
        kernel,
        out_shape=jax.ShapeDtypeStruct((b, c, n), out_dtype),
        grid=(b,),
        in_specs=[
            pl.BlockSpec((1, c, n), lambda i: (i, 0, 0)),      # x (channel-major)
            pl.BlockSpec((3 * Hd, c), lambda i: (0, 0)),       # wqkv
            pl.BlockSpec((c, Hd), lambda i: (0, 0)),           # wout
            pl.BlockSpec((c, 1), lambda i: (0, 0)),            # bout
            pl.BlockSpec((c, 1), lambda i: (0, 0)),            # gamma
            pl.BlockSpec((c, 1), lambda i: (0, 0)),            # beta
            pl.BlockSpec((Hd, Hd), lambda i: (0, 0)),          # head mask
        ],
        out_specs=pl.BlockSpec((1, c, n), lambda i: (i, 0, 0)),
        compiler_params=pltpu.CompilerParams(
            dimension_semantics=("parallel",),
            vmem_limit_bytes=vmem_limit_bytes),
    )(x, params["wqkv"], params["wout"], params["bout"],
      params["gamma"], params["beta"], mask)

    # (B, C, N) -> NCHW is again a free reshape.
    return out.reshape(b, c, h, w)


def linear_attention_ref(x_nchw, params, *, heads=4, dim_head=32, eps=1e-5):
    """Pure-JAX f32 reference mirroring the PyTorch forward exactly."""
    b, c, h, w = x_nchw.shape
    n = h * w
    Hd = heads * dim_head
    scale = dim_head ** (-0.5)

    x = x_nchw.reshape(b, c, n).astype(jnp.float32)                  # (B, C, N)
    qkv = jnp.einsum("oc,bcn->bon", params["wqkv"], x)               # (B, 3Hd, N)
    q, k, v = jnp.split(qkv, 3, axis=1)

    def to_heads(t):  # (B, Hd, N) -> (B, heads, d, N), head-major channels
        return t.reshape(b, heads, dim_head, n)

    q, k, v = map(to_heads, (q, k, v))
    q = jax.nn.softmax(q, axis=-2) * scale
    k = jax.nn.softmax(k, axis=-1)
    context = jnp.einsum("bhdn,bhen->bhde", k, v)
    out = jnp.einsum("bhde,bhdn->bhen", context, q).reshape(b, Hd, n)

    y = jnp.einsum("co,bon->bcn", params["wout"], out) + params["bout"][None, :, None]
    mean = jnp.mean(y, axis=(1, 2), keepdims=True)
    var = jnp.mean((y - mean) ** 2, axis=(1, 2), keepdims=True)
    y = (y - mean) / jnp.sqrt(var + eps)
    y = y * params["gamma"][None, :, None] + params["beta"][None, :, None]
    return y.reshape(b, c, h, w)


if __name__ == "__main__":
    heads, dim_head = 4, 32
    dim = 8                      # LinearAttention channel count (kept small)
    Hd = heads * dim_head
    B, H, W = 2, 16, 16          # N = 256 tokens -> full 128-lane stores

    key = jax.random.PRNGKey(0)
    k1, k2, k3, k4 = jax.random.split(key, 4)

    raw_params = {
        # Conv2d(dim, 3*Hd, 1, bias=False) weight (3Hd, dim, 1, 1) -> (3Hd, dim)
        "wqkv": 0.1 * jax.random.normal(k1, (3 * Hd, dim), jnp.float32),
        # Conv2d(Hd, dim, 1) weight (dim, Hd, 1, 1) -> (dim, Hd)
        "wout": 0.1 * jax.random.normal(k2, (dim, Hd), jnp.float32),
        "bout": 0.1 * jax.random.normal(k3, (dim,), jnp.float32),
        # GroupNorm(1, dim) defaults
        "gamma": jnp.ones((dim,), jnp.float32),
        "beta": jnp.zeros((dim,), jnp.float32),
    }

    # Prepare (cast / reshape) weights once at setup, as in a real UNET.
    params = prepare_linear_attention_params(raw_params, dim)

    x = jax.random.normal(k4, (B, dim, H, W), jnp.float32)

    out = linear_attention(x, params, heads=heads, dim_head=dim_head)
    out = jax.block_until_ready(out)

    ref = linear_attention_ref(x, raw_params, heads=heads, dim_head=dim_head)
    assert out.shape == (B, dim, H, W)
    assert out.dtype == x.dtype
    max_err = jnp.max(jnp.abs(out.astype(jnp.float32) - ref))
    # bf16 matmul operands (f32 accumulation) -> bf16-level tolerance.
    assert jnp.allclose(out.astype(jnp.float32), ref, atol=2e-2, rtol=2e-2), \
        f"max err {max_err}"

    print("KERNEL_OK")
</pallas_src>

<mosaic_0001>
module attributes {stable_mosaic.version = 11 : i64} {
  func.func @linear_attention_kernel(%arg0: i32, %arg1: memref<1x8x256xf32, #tpu.memory_space<vmem>>, %arg2: memref<384x8xbf16, #tpu.memory_space<vmem>>, %arg3: memref<8x128xbf16, #tpu.memory_space<vmem>>, %arg4: memref<8x1xf32, #tpu.memory_space<vmem>>, %arg5: memref<8x1xf32, #tpu.memory_space<vmem>>, %arg6: memref<8x1xf32, #tpu.memory_space<vmem>>, %arg7: memref<128x128xf32, #tpu.memory_space<vmem>>, %arg8: memref<1x8x256xf32, #tpu.memory_space<vmem>>) attributes {dimension_semantics = [#tpu.dimension_semantics<parallel>], iteration_bounds = array<i64: 2>, scalar_prefetch = 0 : i64, scratch_operands = 0 : i64, tpu.core_type = #tpu.core_type<tc>, window_params = [{transform_indices = @transform_0, window_bounds = array<i64: 1, 8, 256>}, {pipeline_mode = #tpu.pipeline_mode<synchronous>, transform_indices = @transform_1, window_bounds = array<i64: 384, 8>}, {pipeline_mode = #tpu.pipeline_mode<synchronous>, transform_indices = @transform_2, window_bounds = array<i64: 8, 128>}, {pipeline_mode = #tpu.pipeline_mode<synchronous>, transform_indices = @transform_3, window_bounds = array<i64: 8, 1>}, {pipeline_mode = #tpu.pipeline_mode<synchronous>, transform_indices = @transform_4, window_bounds = array<i64: 8, 1>}, {pipeline_mode = #tpu.pipeline_mode<synchronous>, transform_indices = @transform_5, window_bounds = array<i64: 8, 1>}, {pipeline_mode = #tpu.pipeline_mode<synchronous>, transform_indices = @transform_6, window_bounds = array<i64: 128, 128>}, {transform_indices = @transform_7, window_bounds = array<i64: 1, 8, 256>}]} {
    %c0 = arith.constant 0 : index
    %c0_0 = arith.constant 0 : index
    %c0_1 = arith.constant 0 : index
    %0 = vector.load %arg1[%c0, %c0_0, %c0_1] : memref<1x8x256xf32, #tpu.memory_space<vmem>>, vector<1x8x256xf32>
    %1 = vector.shape_cast %0 : vector<1x8x256xf32> to vector<8x256xf32>
    %2 = arith.truncf %1 : vector<8x256xf32> to vector<8x256xbf16>
    %c0_2 = arith.constant 0 : index
    %c0_3 = arith.constant 0 : index
    %3 = vector.load %arg2[%c0_2, %c0_3] : memref<384x8xbf16, #tpu.memory_space<vmem>>, vector<384x8xbf16>
    %cst = arith.constant dense<0.000000e+00> : vector<384x256xf32>
    %4 = tpu.matmul %3, %2, %cst {dimension_numbers = #tpu.dot_dimension_numbers<[1], [0], [0], [1], [0, 0, 1, 1], [], []>} : vector<384x8xbf16>, vector<8x256xbf16>, vector<384x256xf32> -> vector<384x256xf32>
    %5 = vector.extract_strided_slice %4 {offsets = [0, 0], sizes = [128, 256], strides = [1, 1]} : vector<384x256xf32> to vector<128x256xf32>
    %6 = vector.extract_strided_slice %4 {offsets = [128, 0], sizes = [128, 256], strides = [1, 1]} : vector<384x256xf32> to vector<128x256xf32>
    %7 = vector.extract_strided_slice %4 {offsets = [256, 0], sizes = [128, 256], strides = [1, 1]} : vector<384x256xf32> to vector<128x256xf32>
    %8 = arith.truncf %7 : vector<128x256xf32> to vector<128x256xbf16>
    %9 = vector.shape_cast %5 : vector<128x256xf32> to vector<4x32x256xf32>
    %cst_4 = arith.constant dense<0xFF800000> : vector<4x256xf32>
    %10 = vector.multi_reduction <maximumf>, %9, %cst_4 [1] : vector<4x32x256xf32> to vector<4x256xf32>
    %11 = vector.shape_cast %10 : vector<4x256xf32> to vector<4x1x256xf32>
    %12 = vector.broadcast %11 : vector<4x1x256xf32> to vector<4x32x256xf32>
    %13 = arith.subf %9, %12 : vector<4x32x256xf32>
    %14 = math.exp %13 : vector<4x32x256xf32>
    %cst_5 = arith.constant dense<0.000000e+00> : vector<4x256xf32>
    %15 = vector.multi_reduction <add>, %14, %cst_5 [1] : vector<4x32x256xf32> to vector<4x256xf32>
    %16 = vector.shape_cast %15 : vector<4x256xf32> to vector<4x1x256xf32>
    %17 = tpu.reciprocal %16 {approx = true} : vector<4x1x256xf32> -> vector<4x1x256xf32>
    %cst_6 = arith.constant 0.176776692 : f32
    %18 = vector.broadcast %cst_6 : f32 to vector<4x1x256xf32>
    %19 = arith.mulf %17, %18 : vector<4x1x256xf32>
    %20 = vector.broadcast %19 : vector<4x1x256xf32> to vector<4x32x256xf32>
    %21 = arith.mulf %14, %20 : vector<4x32x256xf32>
    %22 = vector.shape_cast %21 : vector<4x32x256xf32> to vector<128x256xf32>
    %23 = arith.truncf %22 : vector<128x256xf32> to vector<128x256xbf16>
    %cst_7 = arith.constant dense<0xFF800000> : vector<128xf32>
    %24 = vector.multi_reduction <maximumf>, %6, %cst_7 [1] : vector<128x256xf32> to vector<128xf32>
    %25 = vector.shape_cast %24 : vector<128xf32> to vector<128x1xf32>
    %26 = vector.broadcast %25 : vector<128x1xf32> to vector<128x256xf32>
    %27 = arith.subf %6, %26 : vector<128x256xf32>
    %28 = math.exp %27 : vector<128x256xf32>
    %cst_8 = arith.constant dense<0.000000e+00> : vector<128xf32>
    %29 = vector.multi_reduction <add>, %28, %cst_8 [1] : vector<128x256xf32> to vector<128xf32>
    %30 = vector.shape_cast %29 : vector<128xf32> to vector<128x1xf32>
    %31 = tpu.reciprocal %30 {approx = true} : vector<128x1xf32> -> vector<128x1xf32>
    %32 = vector.broadcast %31 : vector<128x1xf32> to vector<128x256xf32>
    %33 = arith.mulf %28, %32 : vector<128x256xf32>
    %34 = arith.truncf %33 : vector<128x256xf32> to vector<128x256xbf16>
    %cst_9 = arith.constant dense<0.000000e+00> : vector<128x128xf32>
    %35 = tpu.matmul %8, %34, %cst_9 {dimension_numbers = #tpu.dot_dimension_numbers<[1], [1], [0], [0], [0, 0, 1, 0], [], []>} : vector<128x256xbf16>, vector<128x256xbf16>, vector<128x128xf32> -> vector<128x128xf32>
    %c0_10 = arith.constant 0 : index
    %c0_11 = arith.constant 0 : index
    %36 = vector.load %arg7[%c0_10, %c0_11] : memref<128x128xf32, #tpu.memory_space<vmem>>, vector<128x128xf32>
    %37 = arith.mulf %35, %36 : vector<128x128xf32>
    %38 = arith.truncf %37 : vector<128x128xf32> to vector<128x128xbf16>
    %cst_12 = arith.constant dense<0.000000e+00> : vector<128x256xf32>
    %39 = tpu.matmul %38, %23, %cst_12 {dimension_numbers = #tpu.dot_dimension_numbers<[1], [0], [0], [1], [0, 0, 1, 1], [], []>} : vector<128x128xbf16>, vector<128x256xbf16>, vector<128x256xf32> -> vector<128x256xf32>
    %c0_13 = arith.constant 0 : index
    %c0_14 = arith.constant 0 : index
    %40 = vector.load %arg3[%c0_13, %c0_14] : memref<8x128xbf16, #tpu.memory_space<vmem>>, vector<8x128xbf16>
    %41 = arith.truncf %39 : vector<128x256xf32> to vector<128x256xbf16>
    %cst_15 = arith.constant dense<0.000000e+00> : vector<8x256xf32>
    %42 = tpu.matmul %40, %41, %cst_15 {dimension_numbers = #tpu.dot_dimension_numbers<[1], [0], [0], [1], [0, 0, 1, 1], [], []>} : vector<8x128xbf16>, vector<128x256xbf16>, vector<8x256xf32> -> vector<8x256xf32>
    %c0_16 = arith.constant 0 : index
    %c0_17 = arith.constant 0 : index
    %43 = vector.load %arg4[%c0_16, %c0_17] : memref<8x1xf32, #tpu.memory_space<vmem>>, vector<8x1xf32>
    %44 = vector.broadcast %43 : vector<8x1xf32> to vector<8x256xf32>
    %45 = arith.addf %42, %44 : vector<8x256xf32>
    %46 = vector.shape_cast %45 : vector<8x256xf32> to vector<1x8x256xf32>
    %cst_18 = arith.constant dense<0.000000e+00> : vector<1xf32>
    %47 = vector.multi_reduction <add>, %46, %cst_18 [1, 2] : vector<1x8x256xf32> to vector<1xf32>
    %48 = vector.shape_cast %47 : vector<1xf32> to vector<1x1x1xf32>
    %49 = vector.extract %48[0, 0, 0] : f32 from vector<1x1x1xf32>
    %50 = vector.broadcast %49 : f32 to vector<1x1xf32>
    %cst_19 = arith.constant 4.8828125E-4 : f32
    %51 = vector.broadcast %cst_19 : f32 to vector<1x1xf32>
    %52 = arith.mulf %50, %51 : vector<1x1xf32>
    %53 = vector.broadcast %52 : vector<1x1xf32> to vector<8x256xf32>
    %54 = arith.subf %45, %53 : vector<8x256xf32>
    %55 = arith.mulf %54, %54 : vector<8x256xf32>
    %56 = vector.shape_cast %55 : vector<8x256xf32> to vector<1x8x256xf32>
    %cst_20 = arith.constant dense<0.000000e+00> : vector<1xf32>
    %57 = vector.multi_reduction <add>, %56, %cst_20 [1, 2] : vector<1x8x256xf32> to vector<1xf32>
    %58 = vector.shape_cast %57 : vector<1xf32> to vector<1x1x1xf32>
    %59 = vector.extract %58[0, 0, 0] : f32 from vector<1x1x1xf32>
    %60 = vector.broadcast %59 : f32 to vector<1x1xf32>
    %cst_21 = arith.constant 4.8828125E-4 : f32
    %61 = vector.broadcast %cst_21 : f32 to vector<1x1xf32>
    %62 = arith.mulf %60, %61 : vector<1x1xf32>
    %cst_22 = arith.constant 9.99999974E-6 : f32
    %63 = vector.broadcast %cst_22 : f32 to vector<1x1xf32>
    %64 = arith.addf %62, %63 : vector<1x1xf32>
    %65 = math.rsqrt %64 : vector<1x1xf32>
    %66 = vector.broadcast %65 : vector<1x1xf32> to vector<8x256xf32>
    %67 = arith.mulf %54, %66 : vector<8x256xf32>
    %c0_23 = arith.constant 0 : index
    %c0_24 = arith.constant 0 : index
    %68 = vector.load %arg5[%c0_23, %c0_24] : memref<8x1xf32, #tpu.memory_space<vmem>>, vector<8x1xf32>
    %69 = vector.broadcast %68 : vector<8x1xf32> to vector<8x256xf32>
    %70 = arith.mulf %67, %69 : vector<8x256xf32>
    %c0_25 = arith.constant 0 : index
    %c0_26 = arith.constant 0 : index
    %71 = vector.load %arg6[%c0_25, %c0_26] : memref<8x1xf32, #tpu.memory_space<vmem>>, vector<8x1xf32>
    %72 = vector.broadcast %71 : vector<8x1xf32> to vector<8x256xf32>
    %73 = arith.addf %70, %72 : vector<8x256xf32>
    %c0_27 = arith.constant 0 : index
    %c0_28 = arith.constant 0 : index
    %c0_29 = arith.constant 0 : index
    %74 = vector.load %arg8[%c0_27, %c0_28, %c0_29] : memref<1x8x256xf32, #tpu.memory_space<vmem>>, vector<1x8x256xf32>
    %75 = vector.shape_cast %74 : vector<1x8x256xf32> to vector<8x256xf32>
    %76 = vector.shape_cast %73 : vector<8x256xf32> to vector<1x8x256xf32>
    tpu.vector_store %arg8[%c0_27, %c0_28, %c0_29], %76 {strides = array<i32>} : memref<1x8x256xf32, #tpu.memory_space<vmem>>, vector<1x8x256xf32>,
    return
  }
  func.func @transform_0(%arg0: i32) -> (i32, i32, i32) {
    %c0_i32 = arith.constant 0 : i32
    %c0_i32_0 = arith.constant 0 : i32
    %c0_i32_1 = arith.constant 0 : i32
    return %arg0, %c0_i32, %c0_i32_0 : i32, i32, i32
  }
  func.func @transform_1(%arg0: i32) -> (i32, i32) {
    %c0_i32 = arith.constant 0 : i32
    %c0_i32_0 = arith.constant 0 : i32
    %c0_i32_1 = arith.constant 0 : i32
    return %c0_i32, %c0_i32_0 : i32, i32
  }
  func.func @transform_2(%arg0: i32) -> (i32, i32) {
    %c0_i32 = arith.constant 0 : i32
    %c0_i32_0 = arith.constant 0 : i32
    %c0_i32_1 = arith.constant 0 : i32
    return %c0_i32, %c0_i32_0 : i32, i32
  }
  func.func @transform_3(%arg0: i32) -> (i32, i32) {
    %c0_i32 = arith.constant 0 : i32
    %c0_i32_0 = arith.constant 0 : i32
    %c0_i32_1 = arith.constant 0 : i32
    return %c0_i32, %c0_i32_0 : i32, i32
  }
  func.func @transform_4(%arg0: i32) -> (i32, i32) {
    %c0_i32 = arith.constant 0 : i32
    %c0_i32_0 = arith.constant 0 : i32
    %c0_i32_1 = arith.constant 0 : i32
    return %c0_i32, %c0_i32_0 : i32, i32
  }
  func.func @transform_5(%arg0: i32) -> (i32, i32) {
    %c0_i32 = arith.constant 0 : i32
    %c0_i32_0 = arith.constant 0 : i32
    %c0_i32_1 = arith.constant 0 : i32
    return %c0_i32, %c0_i32_0 : i32, i32
  }
  func.func @transform_6(%arg0: i32) -> (i32, i32) {
    %c0_i32 = arith.constant 0 : i32
    %c0_i32_0 = arith.constant 0 : i32
    %c0_i32_1 = arith.constant 0 : i32
    return %c0_i32, %c0_i32_0 : i32, i32
  }
  func.func @transform_7(%arg0: i32) -> (i32, i32, i32) {
    %c0_i32 = arith.constant 0 : i32
    %c0_i32_0 = arith.constant 0 : i32
    %c0_i32_1 = arith.constant 0 : i32
    return %arg0, %c0_i32, %c0_i32_0 : i32, i32, i32
  }
}

</mosaic_0001>

<llo_original>
// kernel: tpu_custom_call.1
$region0: #{tpu_custom_call.1}
  #allocation0 [shape = 'u32[]', space=smem, size = 0x4, offset = 0x4, fixed_abs, tag = 'smem constant byte address 0x4 - core index']
  #allocation1 [shape = 'u32[72,128]{1,0:T(1,128)}', space=vmem, size = 0x9000, scoped, tag = 'internal scratch']
  %s0 = inlined_call_operand.vmem [shape: f32[2,8,256], index: 0, kind: input, shape index: {}]
  %s1 = inlined_call_operand.vmem [shape: bf16[384,8], index: 1, kind: input, shape index: {}]
  %s2 = inlined_call_operand.vmem [shape: bf16[8,128], index: 2, kind: input, shape index: {}]
  %s3 = inlined_call_operand.vmem [shape: f32[8,1], index: 3, kind: input, shape index: {}]
  %s4 = inlined_call_operand.vmem [shape: f32[8,1], index: 4, kind: input, shape index: {}]
  %s5 = inlined_call_operand.vmem [shape: f32[8,1], index: 5, kind: input, shape index: {}]
  %s6 = inlined_call_operand.vmem [shape: f32[128,128], index: 6, kind: input, shape index: {}]
  %s7 = inlined_call_operand.hbm [shape: f32[2,8,256], index: 7, kind: output, shape index: {}]
  %s8 = sld [smem:[#allocation0]]
  $region61: #{tpu_custom_call.1} parent=0
    _
  %s10 = ssub.s32 1, %s8
  %s11 = scalar_select 0, %s10, %s8
  $region1: #{tpu_custom_call.1} parent=0
    #allocation2 [shape = 'u8[16384]{0}', space=vmem, size = 0x4000, scoped, tag = 'output window, operand 0']
    #allocation3 [shape = 's32[2]{0}', space=sflag, size = 0x8, scoped, tag = 'scoped memory for tpu_custom_call.1']
    %12 = vsyncpa [#allocation3], 0
    %s13 = scalar_lea.sflag [#allocation3], 1
    %14 = vsyncpa %s13, 0
    loop: start=0, step=1, limit=4
    $region2: #{tpu_custom_call.1} parent=1 // loop_pre_header
      _
    $region3: #{tpu_custom_call.1} parent=1 // loop_header
      %s16 = sphi 0, %s20
      %p17 = scmp.ge.s32.totalorder %s16, 4
      %s26 = sphi 0, %s28
      %s29 = sphi 0, %s26
      %s30 = sphi 0, %s29
      %s46 = sphi 0, %s30
      %s50 = sphi 0, %s50
      %s52 = sphi 0, %s50
      %s53 = sphi 0, %s52
      %s67 = sphi 0, %s53
      %s71 = sphi 0, %s71
      %s73 = sphi 0, %s71
      %s74 = sphi 0, %s73
      %s88 = sphi 0, %s74
      %s92 = sphi 0, %s92
      %s94 = sphi 0, %s92
      %s95 = sphi 0, %s94
      %s109 = sphi 0, %s95
      %s113 = sphi 0, %s113
      %s115 = sphi 0, %s113
      %s116 = sphi 0, %s115
      %s130 = sphi 0, %s116
      %s134 = sphi 0, %s134
      %s136 = sphi 0, %s134
      %s137 = sphi 0, %s136
      %s151 = sphi 0, %s137
      %s155 = sphi 0, %s155
      %s157 = sphi 0, %s155
      %s158 = sphi 0, %s157
      %s172 = sphi 0, %s158
      %s178 = sphi 0, %s180
      %s181 = sphi 0, %s178
      %s182 = sphi 0, %s181
      %s198 = sphi 0, %s182
    $region4: #{tpu_custom_call.1} parent=1 // loop_header_branch
      %19 = sbr.rel (%p17) target = $region8
    $region5: #{tpu_custom_call.1} parent=1 // loop_body
      %s21 = ssub.s32 %s16, 1
      %s22 = ssub.s32 %s16, 2
      %s23 = sadd.s32 %s16, 1
      %s24 = ssub.s32 %s16, %s23
      %p25 = scmp.eq.s32.totalorder %s24, 0
      %s27 = sadd.s32 %s26, 1
      %s28 = scalar_select %p25, %s26, %s27
      %p31 = pneg %p25
      %p32 = scmp.eq.s32.totalorder %s16, 1
      %p33 = por %p31, %p32
      %p34 = scmp.ne.s32.totalorder %s26, %s29
      %p35 = scmp.eq.s32.totalorder %s16, 0
      %p36 = por %p34, %p35
      %p37 = scmp.ne.s32.totalorder %s26, %s29
      %p38 = scmp.eq.s32.totalorder %s21, 1
      %p39 = por %p37, %p38
      %p40 = scmp.ne.s32.totalorder %s29, %s30
      %p41 = scmp.eq.s32.totalorder %s21, 0
      %p42 = por %p40, %p41
      %p43 = scmp.ne.s32.totalorder %s29, %s30
      %p44 = scmp.eq.s32.totalorder %s22, 1
      %p45 = por %p43, %p44
      %p47 = scmp.ne.s32.totalorder %s30, %s46
      %p48 = scmp.eq.s32.totalorder %s22, 0
      %p49 = por %p47, %p48
      %s51 = sadd.s32 %s50, 1
      %p54 = scmp.eq.s32.totalorder %s16, 1
      %p55 = scmp.ne.s32.totalorder %s50, %s52
      %p56 = scmp.eq.s32.totalorder %s16, 0
      %p57 = por %p55, %p56
      %p58 = scmp.ne.s32.totalorder %s50, %s52
      %p59 = scmp.eq.s32.totalorder %s21, 1
      %p60 = por %p58, %p59
      %p61 = scmp.ne.s32.totalorder %s52, %s53
      %p62 = scmp.eq.s32.totalorder %s21, 0
      %p63 = por %p61, %p62
      %p64 = scmp.ne.s32.totalorder %s52, %s53
      %p65 = scmp.eq.s32.totalorder %s22, 1
      %p66 = por %p64, %p65
      %p68 = scmp.ne.s32.totalorder %s53, %s67
      %p69 = scmp.eq.s32.totalorder %s22, 0
      %p70 = por %p68, %p69
      %s72 = sadd.s32 %s71, 1
      %p75 = scmp.eq.s32.totalorder %s16, 1
      %p76 = scmp.ne.s32.totalorder %s71, %s73
      %p77 = scmp.eq.s32.totalorder %s16, 0
      %p78 = por %p76, %p77
      %p79 = scmp.ne.s32.totalorder %s71, %s73
      %p80 = scmp.eq.s32.totalorder %s21, 1
      %p81 = por %p79, %p80
      %p82 = scmp.ne.s32.totalorder %s73, %s74
      %p83 = scmp.eq.s32.totalorder %s21, 0
      %p84 = por %p82, %p83
      %p85 = scmp.ne.s32.totalorder %s73, %s74
      %p86 = scmp.eq.s32.totalorder %s22, 1
      %p87 = por %p85, %p86
      %p89 = scmp.ne.s32.totalorder %s74, %s88
      %p90 = scmp.eq.s32.totalorder %s22, 0
      %p91 = por %p89, %p90
      %s93 = sadd.s32 %s92, 1
      %p96 = scmp.eq.s32.totalorder %s16, 1
      %p97 = scmp.ne.s32.totalorder %s92, %s94
      %p98 = scmp.eq.s32.totalorder %s16, 0
      %p99 = por %p97, %p98
      %p100 = scmp.ne.s32.totalorder %s92, %s94
      %p101 = scmp.eq.s32.totalorder %s21, 1
      %p102 = por %p100, %p101
      %p103 = scmp.ne.s32.totalorder %s94, %s95
      %p104 = scmp.eq.s32.totalorder %s21, 0
      %p105 = por %p103, %p104
      %p106 = scmp.ne.s32.totalorder %s94, %s95
      %p107 = scmp.eq.s32.totalorder %s22, 1
      %p108 = por %p106, %p107
      %p110 = scmp.ne.s32.totalorder %s95, %s109
      %p111 = scmp.eq.s32.totalorder %s22, 0
      %p112 = por %p110, %p111
      %s114 = sadd.s32 %s113, 1
      %p117 = scmp.eq.s32.totalorder %s16, 1
      %p118 = scmp.ne.s32.totalorder %s113, %s115
      %p119 = scmp.eq.s32.totalorder %s16, 0
      %p120 = por %p118, %p119
      %p121 = scmp.ne.s32.totalorder %s113, %s115
      %p122 = scmp.eq.s32.totalorder %s21, 1
      %p123 = por %p121, %p122
      %p124 = scmp.ne.s32.totalorder %s115, %s116
      %p125 = scmp.eq.s32.totalorder %s21, 0
      %p126 = por %p124, %p125
      %p127 = scmp.ne.s32.totalorder %s115, %s116
      %p128 = scmp.eq.s32.totalorder %s22, 1
      %p129 = por %p127, %p128
      %p131 = scmp.ne.s32.totalorder %s116, %s130
      %p132 = scmp.eq.s32.totalorder %s22, 0
      %p133 = por %p131, %p132
      %s135 = sadd.s32 %s134, 1
      %p138 = scmp.eq.s32.totalorder %s16, 1
      %p139 = scmp.ne.s32.totalorder %s134, %s136
      %p140 = scmp.eq.s32.totalorder %s16, 0
      %p141 = por %p139, %p140
      %p142 = scmp.ne.s32.totalorder %s134, %s136
      %p143 = scmp.eq.s32.totalorder %s21, 1
      %p144 = por %p142, %p143
      %p145 = scmp.ne.s32.totalorder %s136, %s137
      %p146 = scmp.eq.s32.totalorder %s21, 0
      %p147 = por %p145, %p146
      %p148 = scmp.ne.s32.totalorder %s136, %s137
      %p149 = scmp.eq.s32.totalorder %s22, 1
      %p150 = por %p148, %p149
      %p152 = scmp.ne.s32.totalorder %s137, %s151
      %p153 = scmp.eq.s32.totalorder %s22, 0
      %p154 = por %p152, %p153
      %s156 = sadd.s32 %s155, 1
      %p159 = scmp.eq.s32.totalorder %s16, 1
      %p160 = scmp.ne.s32.totalorder %s155, %s157
      %p161 = scmp.eq.s32.totalorder %s16, 0
      %p162 = por %p160, %p161
      %p163 = scmp.ne.s32.totalorder %s155, %s157
      %p164 = scmp.eq.s32.totalorder %s21, 1
      %p165 = por %p163, %p164
      %p166 = scmp.ne.s32.totalorder %s157, %s158
      %p167 = scmp.eq.s32.totalorder %s21, 0
      %p168 = por %p166, %p167
      %p169 = scmp.ne.s32.totalorder %s157, %s158
      %p170 = scmp.eq.s32.totalorder %s22, 1
      %p171 = por %p169, %p170
      %p173 = scmp.ne.s32.totalorder %s158, %s172
      %p174 = scmp.eq.s32.totalorder %s22, 0
      %p175 = por %p173, %p174
      %s176 = ssub.s32 %s16, %s23
      %p177 = scmp.eq.s32.totalorder %s176, 0
      %s179 = sadd.s32 %s178, 1
      %s180 = scalar_select %p177, %s178, %s179
      %p183 = pneg %p177
      %p184 = scmp.eq.s32.totalorder %s16, 1
      %p185 = por %p183, %p184
      %p186 = scmp.ne.s32.totalorder %s178, %s181
      %p187 = scmp.eq.s32.totalorder %s16, 0
      %p188 = por %p186, %p187
      %p189 = scmp.ne.s32.totalorder %s178, %s181
      %p190 = scmp.eq.s32.totalorder %s21, 1
      %p191 = por %p189, %p190
      %p192 = scmp.ne.s32.totalorder %s181, %s182
      %p193 = scmp.eq.s32.totalorder %s21, 0
      %p194 = por %p192, %p193
      %p195 = scmp.ne.s32.totalorder %s181, %s182
      %p196 = scmp.eq.s32.totalorder %s22, 1
      %p197 = por %p195, %p196
      %p199 = scmp.ne.s32.totalorder %s182, %s198
      %p200 = scmp.eq.s32.totalorder %s22, 0
      %p201 = por %p199, %p200
      %p202 = scmp.le.s32.totalorder 1, %s16
      %p203 = scmp.lt.s32.totalorder %s16, 3
      %p204 = pnand %p202, %p203
      %p205 = pneg %p204
      // Predicated region
      $region9: #{tpu_custom_call.1} parent=5 // pred_check
        _
      $region10: #{tpu_custom_call.1} parent=5 // pred_check_branch
        %207 = sbr.rel (%p204) target = $region12
      $region11: #{tpu_custom_call.1} parent=5 // pred_region
        %s208 = ssub.s32 %s16, 1
        // Predicated region
        $region13: #{tpu_custom_call.1} parent=11 // pred_check
          %p209 = pneg %p63
        $region14: #{tpu_custom_call.1} parent=11 // pred_check_branch
          %211 = sbr.rel (%p209) target = $region16
        $region15: #{tpu_custom_call.1} parent=11 // pred_region
          _
        $region16: #{tpu_custom_call.1} parent=11 // pred_fallthru
          _
        // Predicated region
        $region17: #{tpu_custom_call.1} parent=11 // pred_check
          %p212 = pneg %p84
        $region18: #{tpu_custom_call.1} parent=11 // pred_check_branch
          %214 = sbr.rel (%p212) target = $region20
        $region19: #{tpu_custom_call.1} parent=11 // pred_region
          _
        $region20: #{tpu_custom_call.1} parent=11 // pred_fallthru
          _
        // Predicated region
        $region21: #{tpu_custom_call.1} parent=11 // pred_check
          %p215 = pneg %p105
        $region22: #{tpu_custom_call.1} parent=11 // pred_check_branch
          %217 = sbr.rel (%p215) target = $region24
        $region23: #{tpu_custom_call.1} parent=11 // pred_region
          _
        $region24: #{tpu_custom_call.1} parent=11 // pred_fallthru
          _
        // Predicated region
        $region25: #{tpu_custom_call.1} parent=11 // pred_check
          %p218 = pneg %p126
        $region26: #{tpu_custom_call.1} parent=11 // pred_check_branch
          %220 = sbr.rel (%p218) target = $region28
        $region27: #{tpu_custom_call.1} parent=11 // pred_region
          _
        $region28: #{tpu_custom_call.1} parent=11 // pred_fallthru
          _
        // Predicated region
        $region29: #{tpu_custom_call.1} parent=11 // pred_check
          %p221 = pneg %p147
        $region30: #{tpu_custom_call.1} parent=11 // pred_check_branch
          %223 = sbr.rel (%p221) target = $region32
        $region31: #{tpu_custom_call.1} parent=11 // pred_region
          _
        $region32: #{tpu_custom_call.1} parent=11 // pred_fallthru
          _
        // Predicated region
        $region33: #{tpu_custom_call.1} parent=11 // pred_check
          %p224 = pneg %p168
        $region34: #{tpu_custom_call.1} parent=11 // pred_check_branch
          %226 = sbr.rel (%p224) target = $region36
        $region35: #{tpu_custom_call.1} parent=11 // pred_region
          _
        $region36: #{tpu_custom_call.1} parent=11 // pred_fallthru
          _
      $region12: #{tpu_custom_call.1} parent=5 // pred_fallthru
        _
      %p227 = scmp.lt.s32.totalorder %s16, 2
      // Predicated region
      $region37: #{tpu_custom_call.1} parent=5 // pred_check
        %p228 = pneg %p227
      $region38: #{tpu_custom_call.1} parent=5 // pred_check_branch
        %230 = sbr.rel (%p228) target = $region40
      $region39: #{tpu_custom_call.1} parent=5 // pred_region
        // Predicated region
        $region41: #{tpu_custom_call.1} parent=39 // pred_check
          %p231 = pneg %p36
        $region42: #{tpu_custom_call.1} parent=39 // pred_check_branch
          %233 = sbr.rel (%p231) target = $region44
        $region43: #{tpu_custom_call.1} parent=39 // pred_region
          %p234 = scmp.lt.s32.totalorder %s16, 1
          %s235 = scalar_select %p234, %s16, 1
          %s236 = smul.addr %s235, 2
          %s237 = smul.addr %s236, 8
          %s238 = scalar_lea.vmem %s0, %s237
        $region44: #{tpu_custom_call.1} parent=39 // pred_fallthru
          _
      $region40: #{tpu_custom_call.1} parent=5 // pred_fallthru
        _
      %p239 = scmp.le.s32.totalorder 1, %s16
      %p240 = scmp.lt.s32.totalorder %s16, 3
      %p241 = pnand %p239, %p240
      %p242 = pneg %p241
      // Predicated region
      $region45: #{tpu_custom_call.1} parent=5 // pred_check
        _
      $region46: #{tpu_custom_call.1} parent=5 // pred_check_branch
        %244 = sbr.rel (%p241) target = $region48
      $region47: #{tpu_custom_call.1} parent=5 // pred_region
        %s245 = ssub.s32 %s16, 1
        %p246 = scmp.lt.s32.totalorder %s21, 1
        %s247 = scalar_select %p246, %s21, 1
        %s248 = smul.addr %s247, 2
        %s249 = smul.addr %s248, 8
        %s250 = scalar_lea.vmem %s0, %s249
        %p251 = pneg %p42
        %p252 = pneg %p39
        %p253 = pneg %p63
        %p254 = pneg %p60
        %p255 = pneg %p84
        %p256 = pneg %p81
        %p257 = pneg %p105
        %p258 = pneg %p102
        %p259 = pneg %p126
        %p260 = pneg %p123
        %p261 = pneg %p147
        %p262 = pneg %p144
        %p263 = pneg %p168
        %p264 = pneg %p165
        %p265 = pneg %p194
        %p266 = pneg %p191
        %s267 = sand.u32 %s181, 1
        %s268 = scalar_lea.sflag [#allocation3], %s267
        %s269 = sand.u32 %s181, 1
        %s270 = smul.addr %s269, 16
        %s271 = scalar_lea.vmem [#allocation2], %s270
        %p272 = scmp.lt.s32.totalorder %s21, 1
        %s273 = scalar_select %p272, %s21, 1
        %s274 = smul.addr %s273, 2
        %s275 = smul.addr %s274, 8
        %s276 = scalar_lea.vmem %s0, %s275
        %v278 = vld [vmem:[%s276] sm:$0xff]
        %v279 = vld [vmem:[%s276 + $0x8] sm:$0xff]
        %v280 = vpack.c.bf16 %v278, %v278
        %v281 = vpack.c.bf16 %v279, %v279
        %v282 = vld [vmem:[%s1] sm:$0xf]
        %v283 = vld [vmem:[%s1 + $0x4] sm:$0xf]
        %v284 = vld [vmem:[%s1 + $0x8] sm:$0xf]
        %v285 = vld [vmem:[%s1 + $0xc] sm:$0xf]
        %v286 = vld [vmem:[%s1 + $0x10] sm:$0xf]
        %v287 = vld [vmem:[%s1 + $0x14] sm:$0xf]
        %v288 = vld [vmem:[%s1 + $0x18] sm:$0xf]
        %v289 = vld [vmem:[%s1 + $0x1c] sm:$0xf]
        %v290 = vld [vmem:[%s1 + $0x20] sm:$0xf]
        %v291 = vld [vmem:[%s1 + $0x24] sm:$0xf]
        %v292 = vld [vmem:[%s1 + $0x28] sm:$0xf]
        %v293 = vld [vmem:[%s1 + $0x2c] sm:$0xf]
        %v294 = vld [vmem:[%s1 + $0x30] sm:$0xf]
        %v295 = vld [vmem:[%s1 + $0x34] sm:$0xf]
        %v296 = vld [vmem:[%s1 + $0x38] sm:$0xf]
        %v297 = vld [vmem:[%s1 + $0x3c] sm:$0xf]
        %v298 = vld [vmem:[%s1 + $0x40] sm:$0xf]
        %v299 = vld [vmem:[%s1 + $0x44] sm:$0xf]
        %v300 = vld [vmem:[%s1 + $0x48] sm:$0xf]
        %v301 = vld [vmem:[%s1 + $0x4c] sm:$0xf]
        %v302 = vld [vmem:[%s1 + $0x50] sm:$0xf]
        %v303 = vld [vmem:[%s1 + $0x54] sm:$0xf]
        %v304 = vld [vmem:[%s1 + $0x58] sm:$0xf]
        %v305 = vld [vmem:[%s1 + $0x5c] sm:$0xf]
        %v306 = vld [vmem:[%s1 + $0x60] sm:$0xf]
        %v307 = vld [vmem:[%s1 + $0x64] sm:$0xf]
        %v308 = vld [vmem:[%s1 + $0x68] sm:$0xf]
        %v309 = vld [vmem:[%s1 + $0x6c] sm:$0xf]
        %v310 = vld [vmem:[%s1 + $0x70] sm:$0xf]
        %v311 = vld [vmem:[%s1 + $0x74] sm:$0xf]
        %v312 = vld [vmem:[%s1 + $0x78] sm:$0xf]
        %v313 = vld [vmem:[%s1 + $0x7c] sm:$0xf]
        %v314 = vld [vmem:[%s1 + $0x80] sm:$0xf]
        %v315 = vld [vmem:[%s1 + $0x84] sm:$0xf]
        %v316 = vld [vmem:[%s1 + $0x88] sm:$0xf]
        %v317 = vld [vmem:[%s1 + $0x8c] sm:$0xf]
        %v318 = vld [vmem:[%s1 + $0x90] sm:$0xf]
        %v319 = vld [vmem:[%s1 + $0x94] sm:$0xf]
        %v320 = vld [vmem:[%s1 + $0x98] sm:$0xf]
        %v321 = vld [vmem:[%s1 + $0x9c] sm:$0xf]
        %v322 = vld [vmem:[%s1 + $0xa0] sm:$0xf]
        %v323 = vld [vmem:[%s1 + $0xa4] sm:$0xf]
        %v324 = vld [vmem:[%s1 + $0xa8] sm:$0xf]
        %v325 = vld [vmem:[%s1 + $0xac] sm:$0xf]
        %v326 = vld [vmem:[%s1 + $0xb0] sm:$0xf]
        %v327 = vld [vmem:[%s1 + $0xb4] sm:$0xf]
        %v328 = vld [vmem:[%s1 + $0xb8] sm:$0xf]
        %v329 = vld [vmem:[%s1 + $0xbc] sm:$0xf]
        %v378 = vunpack.c.l.b16 %v282
        %v379 = vunpack.c.l.b16 %v283
        %v380 = vunpack.c.l.b16 %v284
        %v381 = vunpack.c.l.b16 %v285
        %v382 = vunpack.c.l.b16 %v286
        %v383 = vunpack.c.l.b16 %v287
        %v384 = vunpack.c.l.b16 %v288
        %v385 = vunpack.c.l.b16 %v289
        %v386 = vunpack.c.l.b16 %v290
        %v387 = vunpack.c.l.b16 %v291
        %v388 = vunpack.c.l.b16 %v292
        %v389 = vunpack.c.l.b16 %v293
        %v390 = vunpack.c.l.b16 %v294
        %v391 = vunpack.c.l.b16 %v295
        %v392 = vunpack.c.l.b16 %v296
        %v393 = vunpack.c.l.b16 %v297
        %v394 = vunpack.c.l.b16 %v298
        %v395 = vunpack.c.l.b16 %v299
        %v396 = vunpack.c.l.b16 %v300
        %v397 = vunpack.c.l.b16 %v301
        %v398 = vunpack.c.l.b16 %v302
        %v399 = vunpack.c.l.b16 %v303
        %v400 = vunpack.c.l.b16 %v304
        %v401 = vunpack.c.l.b16 %v305
        %v402 = vunpack.c.l.b16 %v306
        %v403 = vunpack.c.l.b16 %v307
        %v404 = vunpack.c.l.b16 %v308
        %v405 = vunpack.c.l.b16 %v309
        %v406 = vunpack.c.l.b16 %v310
        %v407 = vunpack.c.l.b16 %v311
        %v408 = vunpack.c.l.b16 %v312
        %v409 = vunpack.c.l.b16 %v313
        %v410 = vunpack.c.l.b16 %v314
        %v411 = vunpack.c.l.b16 %v315
        %v412 = vunpack.c.l.b16 %v316
        %v413 = vunpack.c.l.b16 %v317
        %v414 = vunpack.c.l.b16 %v318
        %v415 = vunpack.c.l.b16 %v319
        %v416 = vunpack.c.l.b16 %v320
        %v417 = vunpack.c.l.b16 %v321
        %v418 = vunpack.c.l.b16 %v322
        %v419 = vunpack.c.l.b16 %v323
        %v420 = vunpack.c.l.b16 %v324
        %v421 = vunpack.c.l.b16 %v325
        %v422 = vunpack.c.l.b16 %v326
        %v423 = vunpack.c.l.b16 %v327
        %v424 = vunpack.c.l.b16 %v328
        %v425 = vunpack.c.l.b16 %v329
        %v426 = vpack.c.b16 %v379, %v378
        %v427 = vpack.c.b16 %v381, %v380
        %v428 = vpack.c.b16 %v383, %v382
        %v429 = vpack.c.b16 %v385, %v384
        %v430 = vpack.c.b16 %v387, %v386
        %v431 = vpack.c.b16 %v389, %v388
        %v432 = vpack.c.b16 %v391, %v390
        %v433 = vpack.c.b16 %v393, %v392
        %v434 = vpack.c.b16 %v395, %v394
        %v435 = vpack.c.b16 %v397, %v396
        %v436 = vpack.c.b16 %v399, %v398
        %v437 = vpack.c.b16 %v401, %v400
        %v438 = vpack.c.b16 %v403, %v402
        %v439 = vpack.c.b16 %v405, %v404
        %v440 = vpack.c.b16 %v407, %v406
        %v441 = vpack.c.b16 %v409, %v408
        %v442 = vpack.c.b16 %v411, %v410
        %v443 = vpack.c.b16 %v413, %v412
        %v444 = vpack.c.b16 %v415, %v414
        %v445 = vpack.c.b16 %v417, %v416
        %v446 = vpack.c.b16 %v419, %v418
        %v447 = vpack.c.b16 %v421, %v420
        %v448 = vpack.c.b16 %v423, %v422
        %v449 = vpack.c.b16 %v425, %v424
        %vm450 = vcmask 64512
        %v452 = vsel %vm450, %v426, 0
        %v455 = vsel %vm450, %v427, 0
        %v458 = vsel %vm450, %v428, 0
        %v461 = vsel %vm450, %v429, 0
        %v464 = vsel %vm450, %v430, 0
        %v467 = vsel %vm450, %v431, 0
        %v470 = vsel %vm450, %v432, 0
        %v473 = vsel %vm450, %v433, 0
        %v476 = vsel %vm450, %v434, 0
        %v479 = vsel %vm450, %v435, 0
        %v482 = vsel %vm450, %v436, 0
        %v485 = vsel %vm450, %v437, 0
        %v488 = vsel %vm450, %v438, 0
        %v491 = vsel %vm450, %v439, 0
        %v494 = vsel %vm450, %v440, 0
        %v497 = vsel %vm450, %v441, 0
        %v500 = vsel %vm450, %v442, 0
        %v503 = vsel %vm450, %v443, 0
        %v506 = vsel %vm450, %v444, 0
        %v509 = vsel %vm450, %v445, 0
        %v512 = vsel %vm450, %v446, 0
        %v515 = vsel %vm450, %v447, 0
        %v518 = vsel %vm450, %v448, 0
        %v521 = vsel %vm450, %v449, 0
        %vm523 = vcmask 1043456
        %v525 = vsel %vm523, %v280, 0
        %v528 = vsel %vm523, %v281, 0
        %530 = vmatpush.bf16.msra.mxu0 0
        %531 = vmatpush.bf16.msra.mxu0 0
        %532 = vmatpush.bf16.msra.mxu0 0
        %533 = vmatpush.bf16.msra.mxu0 0
        %534 = vmatpush.bf16.msra.mxu0 0
        %535 = vmatpush.bf16.msra.mxu0 0
        %536 = vmatpush.bf16.msra.mxu0 0
        %537 = vmatpush.bf16.msra.mxu0 %v525
        %538 = vmatmul.bf16.gmra.mxu0 %v452
        %v539 = vpop.f32.mrf.mxu0
        %v540 = vadd.f32 0.0, %v539
        %v541 = vpop.f32.mrf.mxu0
        %v542 = vadd.f32 0.0, %v541
        %543 = vmatmul.bf16.gmra.mxu0 %v455
        %v544 = vpop.f32.mrf.mxu0
        %v545 = vadd.f32 0.0, %v544
        %v546 = vpop.f32.mrf.mxu0
        %v547 = vadd.f32 0.0, %v546
        %548 = vmatmul.bf16.gmra.mxu0 %v458
        %v549 = vpop.f32.mrf.mxu0
        %v550 = vadd.f32 0.0, %v549
        %v551 = vpop.f32.mrf.mxu0
        %v552 = vadd.f32 0.0, %v551
        %553 = vmatmul.bf16.gmra.mxu0 %v461
        %v554 = vpop.f32.mrf.mxu0
        %v555 = vadd.f32 0.0, %v554
        %v556 = vpop.f32.mrf.mxu0
        %v557 = vadd.f32 0.0, %v556
        %558 = vmatmul.bf16.gmra.mxu0 %v464
        %v559 = vpop.f32.mrf.mxu0
        %v560 = vadd.f32 0.0, %v559
        %v561 = vpop.f32.mrf.mxu0
        %v562 = vadd.f32 0.0, %v561
        %563 = vmatmul.bf16.gmra.mxu0 %v467
        %v564 = vpop.f32.mrf.mxu0
        %v565 = vadd.f32 0.0, %v564
        %v566 = vpop.f32.mrf.mxu0
        %v567 = vadd.f32 0.0, %v566
        %568 = vmatmul.bf16.gmra.mxu0 %v470
        %v569 = vpop.f32.mrf.mxu0
        %v570 = vadd.f32 0.0, %v569
        %v571 = vpop.f32.mrf.mxu0
        %v572 = vadd.f32 0.0, %v571
        %573 = vmatmul.bf16.gmra.mxu0 %v473
        %v574 = vpop.f32.mrf.mxu0
        %v575 = vadd.f32 0.0, %v574
        %v576 = vpop.f32.mrf.mxu0
        %v577 = vadd.f32 0.0, %v576
        %578 = vmatmul.bf16.gmra.mxu0 %v476
        %v579 = vpop.f32.mrf.mxu0
        %v580 = vadd.f32 0.0, %v579
        %v581 = vpop.f32.mrf.mxu0
        %v582 = vadd.f32 0.0, %v581
        %583 = vmatmul.bf16.gmra.mxu0 %v479
        %v584 = vpop.f32.mrf.mxu0
        %v585 = vadd.f32 0.0, %v584
        %v586 = vpop.f32.mrf.mxu0
        %v587 = vadd.f32 0.0, %v586
        %588 = vmatmul.bf16.gmra.mxu0 %v482
        %v589 = vpop.f32.mrf.mxu0
        %v590 = vadd.f32 0.0, %v589
        %v591 = vpop.f32.mrf.mxu0
        %v592 = vadd.f32 0.0, %v591
        %593 = vmatmul.bf16.gmra.mxu0 %v485
        %v594 = vpop.f32.mrf.mxu0
        %v595 = vadd.f32 0.0, %v594
        %v596 = vpop.f32.mrf.mxu0
        %v597 = vadd.f32 0.0, %v596
        %598 = vmatmul.bf16.gmra.mxu0 %v488
        %v599 = vpop.f32.mrf.mxu0
        %v600 = vadd.f32 0.0, %v599
        %v601 = vpop.f32.mrf.mxu0
        %v602 = vadd.f32 0.0, %v601
        %603 = vmatmul.bf16.gmra.mxu0 %v491
        %v604 = vpop.f32.mrf.mxu0
        %v605 = vadd.f32 0.0, %v604
        %v606 = vpop.f32.mrf.mxu0
        %v607 = vadd.f32 0.0, %v606
        %608 = vmatmul.bf16.gmra.mxu0 %v494
        %v609 = vpop.f32.mrf.mxu0
        %v610 = vadd.f32 0.0, %v609
        %v611 = vpop.f32.mrf.mxu0
        %v612 = vadd.f32 0.0, %v611
        %613 = vmatmul.bf16.gmra.mxu0 %v497
        %v614 = vpop.f32.mrf.mxu0
        %v615 = vadd.f32 0.0, %v614
        %v616 = vpop.f32.mrf.mxu0
        %v617 = vadd.f32 0.0, %v616
        %618 = vmatmul.bf16.gmra.mxu0 %v500
        %v619 = vpop.f32.mrf.mxu0
        %v620 = vadd.f32 0.0, %v619
        %v621 = vpop.f32.mrf.mxu0
        %v622 = vadd.f32 0.0, %v621
        %623 = vmatmul.bf16.gmra.mxu0 %v503
        %v624 = vpop.f32.mrf.mxu0
        %v625 = vadd.f32 0.0, %v624
        %v626 = vpop.f32.mrf.mxu0
        %v627 = vadd.f32 0.0, %v626
        %628 = vmatmul.bf16.gmra.mxu0 %v506
        %v629 = vpop.f32.mrf.mxu0
        %v630 = vadd.f32 0.0, %v629
        %v631 = vpop.f32.mrf.mxu0
        %v632 = vadd.f32 0.0, %v631
        %633 = vmatmul.bf16.gmra.mxu0 %v509
        %v634 = vpop.f32.mrf.mxu0
        %v635 = vadd.f32 0.0, %v634
        %v636 = vpop.f32.mrf.mxu0
        %v637 = vadd.f32 0.0, %v636
        %638 = vmatmul.bf16.gmra.mxu0 %v512
        %v639 = vpop.f32.mrf.mxu0
        %v640 = vadd.f32 0.0, %v639
        %v641 = vpop.f32.mrf.mxu0
        %v642 = vadd.f32 0.0, %v641
        %643 = vmatmul.bf16.gmra.mxu0 %v515
        %v644 = vpop.f32.mrf.mxu0
        %v645 = vadd.f32 0.0, %v644
        %v646 = vpop.f32.mrf.mxu0
        %v647 = vadd.f32 0.0, %v646
        %648 = vmatmul.bf16.gmra.mxu0 %v518
        %v649 = vpop.f32.mrf.mxu0
        %v650 = vadd.f32 0.0, %v649
        %v651 = vpop.f32.mrf.mxu0
        %v652 = vadd.f32 0.0, %v651
        %653 = vmatmul.bf16.gmra.mxu0 %v521
        %v654 = vpop.f32.mrf.mxu0
        %v655 = vadd.f32 0.0, %v654
        %v656 = vpop.f32.mrf.mxu0
        %v657 = vadd.f32 0.0, %v656
        %658 = vdwg.mxu0
        %659 = vmatpush.bf16.msra.mxu0 0
        %660 = vmatpush.bf16.msra.mxu0 0
        %661 = vmatpush.bf16.msra.mxu0 0
        %662 = vmatpush.bf16.msra.mxu0 0
        %663 = vmatpush.bf16.msra.mxu0 0
        %664 = vmatpush.bf16.msra.mxu0 0
        %665 = vmatpush.bf16.msra.mxu0 0
        %666 = vmatpush.bf16.msra.mxu0 %v528
        %667 = vmatmul.bf16.gmra.mxu0 %v452
        %v668 = vpop.f32.mrf.mxu0
        %v669 = vadd.f32 0.0, %v668
        %v670 = vpop.f32.mrf.mxu0
        %v671 = vadd.f32 0.0, %v670
        %672 = vmatmul.bf16.gmra.mxu0 %v455
        %v673 = vpop.f32.mrf.mxu0
        %v674 = vadd.f32 0.0, %v673
        %v675 = vpop.f32.mrf.mxu0
        %v676 = vadd.f32 0.0, %v675
        %677 = vmatmul.bf16.gmra.mxu0 %v458
        %v678 = vpop.f32.mrf.mxu0
        %v679 = vadd.f32 0.0, %v678
        %v680 = vpop.f32.mrf.mxu0
        %v681 = vadd.f32 0.0, %v680
        %682 = vmatmul.bf16.gmra.mxu0 %v461
        %v683 = vpop.f32.mrf.mxu0
        %v684 = vadd.f32 0.0, %v683
        %v685 = vpop.f32.mrf.mxu0
        %v686 = vadd.f32 0.0, %v685
        %687 = vmatmul.bf16.gmra.mxu0 %v464
        %v688 = vpop.f32.mrf.mxu0
        %v689 = vadd.f32 0.0, %v688
        %v690 = vpop.f32.mrf.mxu0
        %v691 = vadd.f32 0.0, %v690
        %692 = vmatmul.bf16.gmra.mxu0 %v467
        %v693 = vpop.f32.mrf.mxu0
        %v694 = vadd.f32 0.0, %v693
        %v695 = vpop.f32.mrf.mxu0
        %v696 = vadd.f32 0.0, %v695
        %697 = vmatmul.bf16.gmra.mxu0 %v470
        %v698 = vpop.f32.mrf.mxu0
        %v699 = vadd.f32 0.0, %v698
        %v700 = vpop.f32.mrf.mxu0
        %v701 = vadd.f32 0.0, %v700
        %702 = vmatmul.bf16.gmra.mxu0 %v473
        %v703 = vpop.f32.mrf.mxu0
        %v704 = vadd.f32 0.0, %v703
        %v705 = vpop.f32.mrf.mxu0
        %v706 = vadd.f32 0.0, %v705
        %707 = vmatmul.bf16.gmra.mxu0 %v476
        %v708 = vpop.f32.mrf.mxu0
        %v709 = vadd.f32 0.0, %v708
        %v710 = vpop.f32.mrf.mxu0
        %v711 = vadd.f32 0.0, %v710
        %712 = vmatmul.bf16.gmra.mxu0 %v479
        %v713 = vpop.f32.mrf.mxu0
        %v714 = vadd.f32 0.0, %v713
        %v715 = vpop.f32.mrf.mxu0
        %v716 = vadd.f32 0.0, %v715
        %717 = vmatmul.bf16.gmra.mxu0 %v482
        %v718 = vpop.f32.mrf.mxu0
        %v719 = vadd.f32 0.0, %v718
        %v720 = vpop.f32.mrf.mxu0
        %v721 = vadd.f32 0.0, %v720
        %722 = vmatmul.bf16.gmra.mxu0 %v485
        %v723 = vpop.f32.mrf.mxu0
        %v724 = vadd.f32 0.0, %v723
        %v725 = vpop.f32.mrf.mxu0
        %v726 = vadd.f32 0.0, %v725
        %727 = vmatmul.bf16.gmra.mxu0 %v488
        %v728 = vpop.f32.mrf.mxu0
        %v729 = vadd.f32 0.0, %v728
        %v730 = vpop.f32.mrf.mxu0
        %v731 = vadd.f32 0.0, %v730
        %732 = vmatmul.bf16.gmra.mxu0 %v491
        %v733 = vpop.f32.mrf.mxu0
        %v734 = vadd.f32 0.0, %v733
        %v735 = vpop.f32.mrf.mxu0
        %v736 = vadd.f32 0.0, %v735
        %737 = vmatmul.bf16.gmra.mxu0 %v494
        %v738 = vpop.f32.mrf.mxu0
        %v739 = vadd.f32 0.0, %v738
        %v740 = vpop.f32.mrf.mxu0
        %v741 = vadd.f32 0.0, %v740
        %742 = vmatmul.bf16.gmra.mxu0 %v497
        %v743 = vpop.f32.mrf.mxu0
        %v744 = vadd.f32 0.0, %v743
        %v745 = vpop.f32.mrf.mxu0
        %v746 = vadd.f32 0.0, %v745
        %747 = vmatmul.bf16.gmra.mxu0 %v500
        %v748 = vpop.f32.mrf.mxu0
        %v749 = vadd.f32 0.0, %v748
        %v750 = vpop.f32.mrf.mxu0
        %v751 = vadd.f32 0.0, %v750
        %752 = vmatmul.bf16.gmra.mxu0 %v503
        %v753 = vpop.f32.mrf.mxu0
        %v754 = vadd.f32 0.0, %v753
        %v755 = vpop.f32.mrf.mxu0
        %v756 = vadd.f32 0.0, %v755
        %757 = vmatmul.bf16.gmra.mxu0 %v506
        %v758 = vpop.f32.mrf.mxu0
        %v759 = vadd.f32 0.0, %v758
        %v760 = vpop.f32.mrf.mxu0
        %v761 = vadd.f32 0.0, %v760
        %762 = vmatmul.bf16.gmra.mxu0 %v509
        %v763 = vpop.f32.mrf.mxu0
        %v764 = vadd.f32 0.0, %v763
        %v765 = vpop.f32.mrf.mxu0
        %v766 = vadd.f32 0.0, %v765
        %767 = vmatmul.bf16.gmra.mxu0 %v512
        %v768 = vpop.f32.mrf.mxu0
        %v769 = vadd.f32 0.0, %v768
        %v770 = vpop.f32.mrf.mxu0
        %v771 = vadd.f32 0.0, %v770
        %772 = vmatmul.bf16.gmra.mxu0 %v515
        %v773 = vpop.f32.mrf.mxu0
        %v774 = vadd.f32 0.0, %v773
        %v775 = vpop.f32.mrf.mxu0
        %v776 = vadd.f32 0.0, %v775
        %777 = vmatmul.bf16.gmra.mxu0 %v518
        %v778 = vpop.f32.mrf.mxu0
        %v779 = vadd.f32 0.0, %v778
        %v780 = vpop.f32.mrf.mxu0
        %v781 = vadd.f32 0.0, %v780
        %782 = vmatmul.bf16.gmra.mxu0 %v521
        %v783 = vpop.f32.mrf.mxu0
        %v784 = vadd.f32 0.0, %v783
        %v785 = vpop.f32.mrf.mxu0
        %v786 = vadd.f32 0.0, %v785
        %787 = vdwg.mxu0
        %v788 = vpack.c.bf16 %v622, %v620
        %v789 = vpack.c.bf16 %v751, %v749
        %v790 = vpack.c.bf16 %v627, %v625
        %v791 = vpack.c.bf16 %v756, %v754
        %v792 = vpack.c.bf16 %v632, %v630
        %v793 = vpack.c.bf16 %v761, %v759
        %v794 = vpack.c.bf16 %v637, %v635
        %v795 = vpack.c.bf16 %v766, %v764
        %v796 = vpack.c.bf16 %v642, %v640
        %v797 = vpack.c.bf16 %v771, %v769
        %v798 = vpack.c.bf16 %v647, %v645
        %v799 = vpack.c.bf16 %v776, %v774
        %v800 = vpack.c.bf16 %v652, %v650
        %v801 = vpack.c.bf16 %v781, %v779
        %v802 = vpack.c.bf16 %v657, %v655
        %v803 = vpack.c.bf16 %v786, %v784
        %v804 = vmax.f32 %v540, %v542
        %v805 = vmax.f32 %v804, %v545
        %v806 = vmax.f32 %v805, %v547
        %v807 = vrot.slane %v806, 4
        %v808 = vmax.f32 %v806, %v807
        %v809 = vrot.slane %v808, 2
        %v810 = vmax.f32 %v808, %v809
        %v811 = vrot.slane %v810, 1
        %v812 = vmax.f32 %v810, %v811
        %v813 = vmax.f32 %v669, %v671
        %v814 = vmax.f32 %v813, %v674
        %v815 = vmax.f32 %v814, %v676
        %v816 = vrot.slane %v815, 4
        %v817 = vmax.f32 %v815, %v816
        %v818 = vrot.slane %v817, 2
        %v819 = vmax.f32 %v817, %v818
        %v820 = vrot.slane %v819, 1
        %v821 = vmax.f32 %v819, %v820
        %v822 = vmax.f32 %v550, %v552
        %v823 = vmax.f32 %v822, %v555
        %v824 = vmax.f32 %v823, %v557
        %v825 = vrot.slane %v824, 4
        %v826 = vmax.f32 %v824, %v825
        %v827 = vrot.slane %v826, 2
        %v828 = vmax.f32 %v826, %v827
        %v829 = vrot.slane %v828, 1
        %v830 = vmax.f32 %v828, %v829
        %v831 = vmax.f32 %v679, %v681
        %v832 = vmax.f32 %v831, %v684
        %v833 = vmax.f32 %v832, %v686
        %v834 = vrot.slane %v833, 4
        %v835 = vmax.f32 %v833, %v834
        %v836 = vrot.slane %v835, 2
        %v837 = vmax.f32 %v835, %v836
        %v838 = vrot.slane %v837, 1
        %v839 = vmax.f32 %v837, %v838
        %v840 = vmax.f32 %v560, %v562
        %v841 = vmax.f32 %v840, %v565
        %v842 = vmax.f32 %v841, %v567
        %v843 = vrot.slane %v842, 4
        %v844 = vmax.f32 %v842, %v843
        %v845 = vrot.slane %v844, 2
        %v846 = vmax.f32 %v844, %v845
        %v847 = vrot.slane %v846, 1
        %v848 = vmax.f32 %v846, %v847
        %v849 = vmax.f32 %v689, %v691
        %v850 = vmax.f32 %v849, %v694
        %v851 = vmax.f32 %v850, %v696
        %v852 = vrot.slane %v851, 4
        %v853 = vmax.f32 %v851, %v852
        %v854 = vrot.slane %v853, 2
        %v855 = vmax.f32 %v853, %v854
        %v856 = vrot.slane %v855, 1
        %v857 = vmax.f32 %v855, %v856
        %v858 = vmax.f32 %v570, %v572
        %v859 = vmax.f32 %v858, %v575
        %v860 = vmax.f32 %v859, %v577
        %v861 = vrot.slane %v860, 4
        %v862 = vmax.f32 %v860, %v861
        %v863 = vrot.slane %v862, 2
        %v864 = vmax.f32 %v862, %v863
        %v865 = vrot.slane %v864, 1
        %v866 = vmax.f32 %v864, %v865
        %v867 = vmax.f32 %v699, %v701
        %v868 = vmax.f32 %v867, %v704
        %v869 = vmax.f32 %v868, %v706
        %v870 = vrot.slane %v869, 4
        %v871 = vmax.f32 %v869, %v870
        %v872 = vrot.slane %v871, 2
        %v873 = vmax.f32 %v871, %v872
        %v874 = vrot.slane %v873, 1
        %v875 = vmax.f32 %v873, %v874
        %v876 = vsub.f32 %v540, %v812
        %v877 = vsub.f32 %v669, %v821
        %v878 = vsub.f32 %v542, %v812
        %v879 = vsub.f32 %v671, %v821
        %v880 = vsub.f32 %v545, %v812
        %v881 = vsub.f32 %v674, %v821
        %v882 = vsub.f32 %v547, %v812
        %v883 = vsub.f32 %v676, %v821
        %v884 = vsub.f32 %v550, %v830
        %v885 = vsub.f32 %v679, %v839
        %v886 = vsub.f32 %v552, %v830
        %v887 = vsub.f32 %v681, %v839
        %v888 = vsub.f32 %v555, %v830
        %v889 = vsub.f32 %v684, %v839
        %v890 = vsub.f32 %v557, %v830
        %v891 = vsub.f32 %v686, %v839
        %v892 = vsub.f32 %v560, %v848
        %v893 = vsub.f32 %v689, %v857
        %v894 = vsub.f32 %v562, %v848
        %v895 = vsub.f32 %v691, %v857
        %v896 = vsub.f32 %v565, %v848
        %v897 = vsub.f32 %v694, %v857
        %v898 = vsub.f32 %v567, %v848
        %v899 = vsub.f32 %v696, %v857
        %v900 = vsub.f32 %v570, %v866
        %v901 = vsub.f32 %v699, %v875
        %v902 = vsub.f32 %v572, %v866
        %v903 = vsub.f32 %v701, %v875
        %v904 = vsub.f32 %v575, %v866
        %v905 = vsub.f32 %v704, %v875
        %v906 = vsub.f32 %v577, %v866
        %v907 = vsub.f32 %v706, %v875
        %v908 = vmul.f32 %v876, 1.442695
        %v909 = vpow.pop %v908
        %v910 = vmul.f32 %v877, 1.442695
        %v911 = vpow.pop %v910
        %v912 = vmul.f32 %v878, 1.442695
        %v913 = vpow.pop %v912
        %v914 = vmul.f32 %v879, 1.442695
        %v915 = vpow.pop %v914
        %v916 = vmul.f32 %v880, 1.442695
        %v917 = vpow.pop %v916
        %v918 = vmul.f32 %v881, 1.442695
        %v919 = vpow.pop %v918
        %v920 = vmul.f32 %v882, 1.442695
        %v921 = vpow.pop %v920
        %v922 = vmul.f32 %v883, 1.442695
        %v923 = vpow.pop %v922
        %v924 = vmul.f32 %v884, 1.442695
        %v925 = vpow.pop %v924
        %v926 = vmul.f32 %v885, 1.442695
        %v927 = vpow.pop %v926
        %v928 = vmul.f32 %v886, 1.442695
        %v929 = vpow.pop %v928
        %v930 = vmul.f32 %v887, 1.442695
        %v931 = vpow.pop %v930
        %v932 = vmul.f32 %v888, 1.442695
        %v933 = vpow.pop %v932
        %v934 = vmul.f32 %v889, 1.442695
        %v935 = vpow.pop %v934
        %v936 = vmul.f32 %v890, 1.442695
        %v937 = vpow.pop %v936
        %v938 = vmul.f32 %v891, 1.442695
        %v939 = vpow.pop %v938
        %v940 = vmul.f32 %v892, 1.442695
        %v941 = vpow.pop %v940
        %v942 = vmul.f32 %v893, 1.442695
        %v943 = vpow.pop %v942
        %v944 = vmul.f32 %v894, 1.442695
        %v945 = vpow.pop %v944
        %v946 = vmul.f32 %v895, 1.442695
        %v947 = vpow.pop %v946
        %v948 = vmul.f32 %v896, 1.442695
        %v949 = vpow.pop %v948
        %v950 = vmul.f32 %v897, 1.442695
        %v951 = vpow.pop %v950
        %v952 = vmul.f32 %v898, 1.442695
        %v953 = vpow.pop %v952
        %v954 = vmul.f32 %v899, 1.442695
        %v955 = vpow.pop %v954
        %v956 = vmul.f32 %v900, 1.442695
        %v957 = vpow.pop %v956
        %v958 = vmul.f32 %v901, 1.442695
        %v959 = vpow.pop %v958
        %v960 = vmul.f32 %v902, 1.442695
        %v961 = vpow.pop %v960
        %v962 = vmul.f32 %v903, 1.442695
        %v963 = vpow.pop %v962
        %v964 = vmul.f32 %v904, 1.442695
        %v965 = vpow.pop %v964
        %v966 = vmul.f32 %v905, 1.442695
        %v967 = vpow.pop %v966
        %v968 = vmul.f32 %v906, 1.442695
        %v969 = vpow.pop %v968
        %v970 = vmul.f32 %v907, 1.442695
        %v971 = vpow.pop %v970
        %v972 = vadd.f32 %v909, %v913
        %v973 = vadd.f32 %v972, %v917
        %v974 = vadd.f32 %v973, %v921
        %v975 = vrot.slane %v974, 4
        %v976 = vadd.f32 %v974, %v975
        %v977 = vrot.slane %v976, 2
        %v978 = vadd.f32 %v976, %v977
        %v979 = vrot.slane %v978, 1
        %v980 = vadd.f32 %v978, %v979
        %v981 = vadd.f32 %v911, %v915
        %v982 = vadd.f32 %v981, %v919
        %v983 = vadd.f32 %v982, %v923
        %v984 = vrot.slane %v983, 4
        %v985 = vadd.f32 %v983, %v984
        %v986 = vrot.slane %v985, 2
        %v987 = vadd.f32 %v985, %v986
        %v988 = vrot.slane %v987, 1
        %v989 = vadd.f32 %v987, %v988
        %v990 = vadd.f32 %v925, %v929
        %v991 = vadd.f32 %v990, %v933
        %v992 = vadd.f32 %v991, %v937
        %v993 = vrot.slane %v992, 4
        %v994 = vadd.f32 %v992, %v993
        %v995 = vrot.slane %v994, 2
        %v996 = vadd.f32 %v994, %v995
        %v997 = vrot.slane %v996, 1
        %v998 = vadd.f32 %v996, %v997
        %v999 = vadd.f32 %v927, %v931
        %v1000 = vadd.f32 %v999, %v935
        %v1001 = vadd.f32 %v1000, %v939
        %v1002 = vrot.slane %v1001, 4
        %v1003 = vadd.f32 %v1001, %v1002
        %v1004 = vrot.slane %v1003, 2
        %v1005 = vadd.f32 %v1003, %v1004
        %v1006 = vrot.slane %v1005, 1
        %v1007 = vadd.f32 %v1005, %v1006
        %v1008 = vadd.f32 %v941, %v945
        %v1009 = vadd.f32 %v1008, %v949
        %v1010 = vadd.f32 %v1009, %v953
        %v1011 = vrot.slane %v1010, 4
        %v1012 = vadd.f32 %v1010, %v1011
        %v1013 = vrot.slane %v1012, 2
        %v1014 = vadd.f32 %v1012, %v1013
        %v1015 = vrot.slane %v1014, 1
        %v1016 = vadd.f32 %v1014, %v1015
        %v1017 = vadd.f32 %v943, %v947
        %v1018 = vadd.f32 %v1017, %v951
        %v1019 = vadd.f32 %v1018, %v955
        %v1020 = vrot.slane %v1019, 4
        %v1021 = vadd.f32 %v1019, %v1020
        %v1022 = vrot.slane %v1021, 2
        %v1023 = vadd.f32 %v1021, %v1022
        %v1024 = vrot.slane %v1023, 1
        %v1025 = vadd.f32 %v1023, %v1024
        %v1026 = vadd.f32 %v957, %v961
        %v1027 = vadd.f32 %v1026, %v965
        %v1028 = vadd.f32 %v1027, %v969
        %v1029 = vrot.slane %v1028, 4
        %v1030 = vadd.f32 %v1028, %v1029
        %v1031 = vrot.slane %v1030, 2
        %v1032 = vadd.f32 %v1030, %v1031
        %v1033 = vrot.slane %v1032, 1
        %v1034 = vadd.f32 %v1032, %v1033
        %v1035 = vadd.f32 %v959, %v963
        %v1036 = vadd.f32 %v1035, %v967
        %v1037 = vadd.f32 %v1036, %v971
        %v1038 = vrot.slane %v1037, 4
        %v1039 = vadd.f32 %v1037, %v1038
        %v1040 = vrot.slane %v1039, 2
        %v1041 = vadd.f32 %v1039, %v1040
        %v1042 = vrot.slane %v1041, 1
        %v1043 = vadd.f32 %v1041, %v1042
        %v1044 = vrcp.pop %v980
        %v1045 = vrcp.pop %v989
        %v1046 = vrcp.pop %v998
        %v1047 = vrcp.pop %v1007
        %v1048 = vrcp.pop %v1016
        %v1049 = vrcp.pop %v1025
        %v1050 = vrcp.pop %v1034
        %v1051 = vrcp.pop %v1043
        %v1052 = vmul.f32 %v1044, 0.17677669
        %v1053 = vmul.f32 %v1045, 0.17677669
        %v1054 = vmul.f32 %v1046, 0.17677669
        %v1055 = vmul.f32 %v1047, 0.17677669
        %v1056 = vmul.f32 %v1048, 0.17677669
        %v1057 = vmul.f32 %v1049, 0.17677669
        %v1058 = vmul.f32 %v1050, 0.17677669
        %v1059 = vmul.f32 %v1051, 0.17677669
        %v1060 = vmul.f32 %v909, %v1052
        %v1061 = vmul.f32 %v911, %v1053
        %v1062 = vmul.f32 %v913, %v1052
        %v1063 = vmul.f32 %v915, %v1053
        %v1064 = vmul.f32 %v917, %v1052
        %v1065 = vmul.f32 %v919, %v1053
        %v1066 = vmul.f32 %v921, %v1052
        %v1067 = vmul.f32 %v923, %v1053
        %v1068 = vmul.f32 %v925, %v1054
        %v1069 = vmul.f32 %v927, %v1055
        %v1070 = vmul.f32 %v929, %v1054
        %v1071 = vmul.f32 %v931, %v1055
        %v1072 = vmul.f32 %v933, %v1054
        %v1073 = vmul.f32 %v935, %v1055
        %v1074 = vmul.f32 %v937, %v1054
        %v1075 = vmul.f32 %v939, %v1055
        %v1076 = vmul.f32 %v941, %v1056
        %v1077 = vmul.f32 %v943, %v1057
        %v1078 = vmul.f32 %v945, %v1056
        %v1079 = vmul.f32 %v947, %v1057
        %v1080 = vmul.f32 %v949, %v1056
        %v1081 = vmul.f32 %v951, %v1057
        %v1082 = vmul.f32 %v953, %v1056
        %v1083 = vmul.f32 %v955, %v1057
        %v1084 = vmul.f32 %v957, %v1058
        %v1085 = vmul.f32 %v959, %v1059
        %v1086 = vmul.f32 %v961, %v1058
        %v1087 = vmul.f32 %v963, %v1059
        %v1088 = vmul.f32 %v965, %v1058
        %v1089 = vmul.f32 %v967, %v1059
        %v1090 = vmul.f32 %v969, %v1058
        %v1091 = vmul.f32 %v971, %v1059
        %v1092 = vpack.c.bf16 %v1062, %v1060
        %v1093 = vpack.c.bf16 %v1063, %v1061
        %v1094 = vpack.c.bf16 %v1066, %v1064
        %v1095 = vpack.c.bf16 %v1067, %v1065
        %v1096 = vpack.c.bf16 %v1070, %v1068
        %v1097 = vpack.c.bf16 %v1071, %v1069
        %v1098 = vpack.c.bf16 %v1074, %v1072
        %v1099 = vpack.c.bf16 %v1075, %v1073
        %v1100 = vpack.c.bf16 %v1078, %v1076
        %v1101 = vpack.c.bf16 %v1079, %v1077
        %v1102 = vpack.c.bf16 %v1082, %v1080
        %v1103 = vpack.c.bf16 %v1083, %v1081
        %v1104 = vpack.c.bf16 %v1086, %v1084
        %v1105 = vpack.c.bf16 %v1087, %v1085
        %v1106 = vpack.c.bf16 %v1090, %v1088
        %v1107 = vpack.c.bf16 %v1091, %v1089
        %v1108 = vmax.f32 %v580, %v709
        %1109 = vmax.xlane.f32.xlu0 %v1108
        %v1110 = vpop.xlane.xlu0 %1109
        %v1111 = vmax.f32 %v582, %v711
        %1112 = vmax.xlane.f32.xlu0 %v1111
        %v1113 = vpop.xlane.xlu0 %1112
        %v1114 = vmax.f32 %v585, %v714
        %1115 = vmax.xlane.f32.xlu0 %v1114
        %v1116 = vpop.xlane.xlu0 %1115
        %v1117 = vmax.f32 %v587, %v716
        %1118 = vmax.xlane.f32.xlu0 %v1117
        %v1119 = vpop.xlane.xlu0 %1118
        %v1120 = vmax.f32 %v590, %v719
        %1121 = vmax.xlane.f32.xlu0 %v1120
        %v1122 = vpop.xlane.xlu0 %1121
        %v1123 = vmax.f32 %v592, %v721
        %1124 = vmax.xlane.f32.xlu0 %v1123
        %v1125 = vpop.xlane.xlu0 %1124
        %v1126 = vmax.f32 %v595, %v724
        %1127 = vmax.xlane.f32.xlu0 %v1126
        %v1128 = vpop.xlane.xlu0 %1127
        %v1129 = vmax.f32 %v597, %v726
        %1130 = vmax.xlane.f32.xlu0 %v1129
        %v1131 = vpop.xlane.xlu0 %1130
        %v1132 = vmax.f32 %v600, %v729
        %1133 = vmax.xlane.f32.xlu0 %v1132
        %v1134 = vpop.xlane.xlu0 %1133
        %v1135 = vmax.f32 %v602, %v731
        %1136 = vmax.xlane.f32.xlu0 %v1135
        %v1137 = vpop.xlane.xlu0 %1136
        %v1138 = vmax.f32 %v605, %v734
        %1139 = vmax.xlane.f32.xlu0 %v1138
        %v1140 = vpop.xlane.xlu0 %1139
        %v1141 = vmax.f32 %v607, %v736
        %1142 = vmax.xlane.f32.xlu0 %v1141
        %v1143 = vpop.xlane.xlu0 %1142
        %v1144 = vmax.f32 %v610, %v739
        %1145 = vmax.xlane.f32.xlu0 %v1144
        %v1146 = vpop.xlane.xlu0 %1145
        %v1147 = vmax.f32 %v612, %v741
        %1148 = vmax.xlane.f32.xlu0 %v1147
        %v1149 = vpop.xlane.xlu0 %1148
        %v1150 = vmax.f32 %v615, %v744
        %1151 = vmax.xlane.f32.xlu0 %v1150
        %v1152 = vpop.xlane.xlu0 %1151
        %v1153 = vmax.f32 %v617, %v746
        %1154 = vmax.xlane.f32.xlu0 %v1153
        %v1155 = vpop.xlane.xlu0 %1154
        %v1156 = vsub.f32 %v580, %v1110
        %v1157 = vsub.f32 %v709, %v1110
        %v1158 = vsub.f32 %v582, %v1113
        %v1159 = vsub.f32 %v711, %v1113
        %v1160 = vsub.f32 %v585, %v1116
        %v1161 = vsub.f32 %v714, %v1116
        %v1162 = vsub.f32 %v587, %v1119
        %v1163 = vsub.f32 %v716, %v1119
        %v1164 = vsub.f32 %v590, %v1122
        %v1165 = vsub.f32 %v719, %v1122
        %v1166 = vsub.f32 %v592, %v1125
        %v1167 = vsub.f32 %v721, %v1125
        %v1168 = vsub.f32 %v595, %v1128
        %v1169 = vsub.f32 %v724, %v1128
        %v1170 = vsub.f32 %v597, %v1131
        %v1171 = vsub.f32 %v726, %v1131
        %v1172 = vsub.f32 %v600, %v1134
        %v1173 = vsub.f32 %v729, %v1134
        %v1174 = vsub.f32 %v602, %v1137
        %v1175 = vsub.f32 %v731, %v1137
        %v1176 = vsub.f32 %v605, %v1140
        %v1177 = vsub.f32 %v734, %v1140
        %v1178 = vsub.f32 %v607, %v1143
        %v1179 = vsub.f32 %v736, %v1143
        %v1180 = vsub.f32 %v610, %v1146
        %v1181 = vsub.f32 %v739, %v1146
        %v1182 = vsub.f32 %v612, %v1149
        %v1183 = vsub.f32 %v741, %v1149
        %v1184 = vsub.f32 %v615, %v1152
        %v1185 = vsub.f32 %v744, %v1152
        %v1186 = vsub.f32 %v617, %v1155
        %v1187 = vsub.f32 %v746, %v1155
        %v1188 = vmul.f32 %v1156, 1.442695
        %v1189 = vpow.pop %v1188
        %v1190 = vmul.f32 %v1157, 1.442695
        %v1191 = vpow.pop %v1190
        %v1192 = vmul.f32 %v1158, 1.442695
        %v1193 = vpow.pop %v1192
        %v1194 = vmul.f32 %v1159, 1.442695
        %v1195 = vpow.pop %v1194
        %v1196 = vmul.f32 %v1160, 1.442695
        %v1197 = vpow.pop %v1196
        %v1198 = vmul.f32 %v1161, 1.442695
        %v1199 = vpow.pop %v1198
        %v1200 = vmul.f32 %v1162, 1.442695
        %v1201 = vpow.pop %v1200
        %v1202 = vmul.f32 %v1163, 1.442695
        %v1203 = vpow.pop %v1202
        %v1204 = vmul.f32 %v1164, 1.442695
        %v1205 = vpow.pop %v1204
        %v1206 = vmul.f32 %v1165, 1.442695
        %v1207 = vpow.pop %v1206
        %v1208 = vmul.f32 %v1166, 1.442695
        %v1209 = vpow.pop %v1208
        %v1210 = vmul.f32 %v1167, 1.442695
        %v1211 = vpow.pop %v1210
        %v1212 = vmul.f32 %v1168, 1.442695
        %v1213 = vpow.pop %v1212
        %v1214 = vmul.f32 %v1169, 1.442695
        %v1215 = vpow.pop %v1214
        %v1216 = vmul.f32 %v1170, 1.442695
        %v1217 = vpow.pop %v1216
        %v1218 = vmul.f32 %v1171, 1.442695
        %v1219 = vpow.pop %v1218
        %v1220 = vmul.f32 %v1172, 1.442695
        %v1221 = vpow.pop %v1220
        %v1222 = vmul.f32 %v1173, 1.442695
        %v1223 = vpow.pop %v1222
        %v1224 = vmul.f32 %v1174, 1.442695
        %v1225 = vpow.pop %v1224
        %v1226 = vmul.f32 %v1175, 1.442695
        %v1227 = vpow.pop %v1226
        %v1228 = vmul.f32 %v1176, 1.442695
        %v1229 = vpow.pop %v1228
        %v1230 = vmul.f32 %v1177, 1.442695
        %v1231 = vpow.pop %v1230
        %v1232 = vmul.f32 %v1178, 1.442695
        %v1233 = vpow.pop %v1232
        %v1234 = vmul.f32 %v1179, 1.442695
        %v1235 = vpow.pop %v1234
        %v1236 = vmul.f32 %v1180, 1.442695
        %v1237 = vpow.pop %v1236
        %v1238 = vmul.f32 %v1181, 1.442695
        %v1239 = vpow.pop %v1238
        %v1240 = vmul.f32 %v1182, 1.442695
        %v1241 = vpow.pop %v1240
        %v1242 = vmul.f32 %v1183, 1.442695
        %v1243 = vpow.pop %v1242
        %v1244 = vmul.f32 %v1184, 1.442695
        %v1245 = vpow.pop %v1244
        %v1246 = vmul.f32 %v1185, 1.442695
        %v1247 = vpow.pop %v1246
        %v1248 = vmul.f32 %v1186, 1.442695
        %v1249 = vpow.pop %v1248
        %v1250 = vmul.f32 %v1187, 1.442695
        %v1251 = vpow.pop %v1250
        %v1252 = vadd.f32 %v1189, %v1191
        %1253 = vadd.xlane.f32.xlu0 %v1252
        %v1254 = vpop.xlane.xlu0 %1253
        %v1255 = vadd.f32 %v1193, %v1195
        %1256 = vadd.xlane.f32.xlu0 %v1255
        %v1257 = vpop.xlane.xlu0 %1256
        %v1258 = vadd.f32 %v1197, %v1199
        %1259 = vadd.xlane.f32.xlu0 %v1258
        %v1260 = vpop.xlane.xlu0 %1259
        %v1261 = vadd.f32 %v1201, %v1203
        %1262 = vadd.xlane.f32.xlu0 %v1261
        %v1263 = vpop.xlane.xlu0 %1262
        %v1264 = vadd.f32 %v1205, %v1207
        %1265 = vadd.xlane.f32.xlu0 %v1264
        %v1266 = vpop.xlane.xlu0 %1265
        %v1267 = vadd.f32 %v1209, %v1211
        %1268 = vadd.xlane.f32.xlu0 %v1267
        %v1269 = vpop.xlane.xlu0 %1268
        %v1270 = vadd.f32 %v1213, %v1215
        %1271 = vadd.xlane.f32.xlu0 %v1270
        %v1272 = vpop.xlane.xlu0 %1271
        %v1273 = vadd.f32 %v1217, %v1219
        %1274 = vadd.xlane.f32.xlu0 %v1273
        %v1275 = vpop.xlane.xlu0 %1274
        %v1276 = vadd.f32 %v1221, %v1223
        %1277 = vadd.xlane.f32.xlu0 %v1276
        %v1278 = vpop.xlane.xlu0 %1277
        %v1279 = vadd.f32 %v1225, %v1227
        %1280 = vadd.xlane.f32.xlu0 %v1279
        %v1281 = vpop.xlane.xlu0 %1280
        %v1282 = vadd.f32 %v1229, %v1231
        %1283 = vadd.xlane.f32.xlu0 %v1282
        %v1284 = vpop.xlane.xlu0 %1283
        %v1285 = vadd.f32 %v1233, %v1235
        %1286 = vadd.xlane.f32.xlu0 %v1285
        %v1287 = vpop.xlane.xlu0 %1286
        %v1288 = vadd.f32 %v1237, %v1239
        %1289 = vadd.xlane.f32.xlu0 %v1288
        %v1290 = vpop.xlane.xlu0 %1289
        %v1291 = vadd.f32 %v1241, %v1243
        %1292 = vadd.xlane.f32.xlu0 %v1291
        %v1293 = vpop.xlane.xlu0 %1292
        %v1294 = vadd.f32 %v1245, %v1247
        %1295 = vadd.xlane.f32.xlu0 %v1294
        %v1296 = vpop.xlane.xlu0 %1295
        %v1297 = vadd.f32 %v1249, %v1251
        %1298 = vadd.xlane.f32.xlu0 %v1297
        %v1299 = vpop.xlane.xlu0 %1298
        %v1300 = vrcp.pop %v1254
        %v1301 = vrcp.pop %v1257
        %v1302 = vrcp.pop %v1260
        %v1303 = vrcp.pop %v1263
        %v1304 = vrcp.pop %v1266
        %v1305 = vrcp.pop %v1269
        %v1306 = vrcp.pop %v1272
        %v1307 = vrcp.pop %v1275
        %v1308 = vrcp.pop %v1278
        %v1309 = vrcp.pop %v1281
        %v1310 = vrcp.pop %v1284
        %v1311 = vrcp.pop %v1287
        %v1312 = vrcp.pop %v1290
        %v1313 = vrcp.pop %v1293
        %v1314 = vrcp.pop %v1296
        %v1315 = vrcp.pop %v1299
        %v1316 = vmul.f32 %v1189, %v1300
        %v1317 = vmul.f32 %v1191, %v1300
        %v1318 = vmul.f32 %v1193, %v1301
        %v1319 = vmul.f32 %v1195, %v1301
        %v1320 = vmul.f32 %v1197, %v1302
        %v1321 = vmul.f32 %v1199, %v1302
        %v1322 = vmul.f32 %v1201, %v1303
        %v1323 = vmul.f32 %v1203, %v1303
        %v1324 = vmul.f32 %v1205, %v1304
        %v1325 = vmul.f32 %v1207, %v1304
        %v1326 = vmul.f32 %v1209, %v1305
        %v1327 = vmul.f32 %v1211, %v1305
        %v1328 = vmul.f32 %v1213, %v1306
        %v1329 = vmul.f32 %v1215, %v1306
        %v1330 = vmul.f32 %v1217, %v1307
        %v1331 = vmul.f32 %v1219, %v1307
        %v1332 = vmul.f32 %v1221, %v1308
        %v1333 = vmul.f32 %v1223, %v1308
        %v1334 = vmul.f32 %v1225, %v1309
        %v1335 = vmul.f32 %v1227, %v1309
        %v1336 = vmul.f32 %v1229, %v1310
        %v1337 = vmul.f32 %v1231, %v1310
        %v1338 = vmul.f32 %v1233, %v1311
        %v1339 = vmul.f32 %v1235, %v1311
        %v1340 = vmul.f32 %v1237, %v1312
        %v1341 = vmul.f32 %v1239, %v1312
        %v1342 = vmul.f32 %v1241, %v1313
        %v1343 = vmul.f32 %v1243, %v1313
        %v1344 = vmul.f32 %v1245, %v1314
        %v1345 = vmul.f32 %v1247, %v1314
        %v1346 = vmul.f32 %v1249, %v1315
        %v1347 = vmul.f32 %v1251, %v1315
        %v1348 = vpack.c.bf16 %v1318, %v1316
        %v1349 = vpack.c.bf16 %v1319, %v1317
        %v1350 = vpack.c.bf16 %v1322, %v1320
        %v1351 = vpack.c.bf16 %v1323, %v1321
        %v1352 = vpack.c.bf16 %v1326, %v1324
        %v1353 = vpack.c.bf16 %v1327, %v1325
        %v1354 = vpack.c.bf16 %v1330, %v1328
        %v1355 = vpack.c.bf16 %v1331, %v1329
        %v1356 = vpack.c.bf16 %v1334, %v1332
        %v1357 = vpack.c.bf16 %v1335, %v1333
        %v1358 = vpack.c.bf16 %v1338, %v1336
        %v1359 = vpack.c.bf16 %v1339, %v1337
        %v1360 = vpack.c.bf16 %v1342, %v1340
        %v1361 = vpack.c.bf16 %v1343, %v1341
        %v1362 = vpack.c.bf16 %v1346, %v1344
        %v1363 = vpack.c.bf16 %v1347, %v1345
        %1364 = vmatpush.bf16.xpose.msra.mxu0 %v1362
        %1365 = vmatpush.bf16.xpose.msra.mxu0 %v1360
        %1366 = vmatpush.bf16.xpose.msra.mxu0 %v1358
        %1367 = vmatpush.bf16.xpose.msra.mxu0 %v1356
        %1368 = vmatpush.bf16.xpose.msra.mxu0 %v1354
        %1369 = vmatpush.bf16.xpose.msra.mxu0 %v1352
        %1370 = vmatpush.bf16.xpose.msra.mxu0 %v1350
        %1371 = vmatpush.bf16.xpose.msra.mxu0 %v1348
        %1372 = vmatmul.bf16.gmra.mxu0 %v788
        %v1373 = vpop.f32.mrf.mxu0
        %v1374 = vadd.f32 0.0, %v1373
        %v1375 = vpop.f32.mrf.mxu0
        %v1376 = vadd.f32 0.0, %v1375
        %1377 = vmatmul.bf16.gmra.mxu0 %v790
        %v1378 = vpop.f32.mrf.mxu0
        %v1379 = vadd.f32 0.0, %v1378
        %v1380 = vpop.f32.mrf.mxu0
        %v1381 = vadd.f32 0.0, %v1380
        %1382 = vmatmul.bf16.gmra.mxu0 %v792
        %v1383 = vpop.f32.mrf.mxu0
        %v1384 = vadd.f32 0.0, %v1383
        %v1385 = vpop.f32.mrf.mxu0
        %v1386 = vadd.f32 0.0, %v1385
        %1387 = vmatmul.bf16.gmra.mxu0 %v794
        %v1388 = vpop.f32.mrf.mxu0
        %v1389 = vadd.f32 0.0, %v1388
        %v1390 = vpop.f32.mrf.mxu0
        %v1391 = vadd.f32 0.0, %v1390
        %1392 = vmatmul.bf16.gmra.mxu0 %v796
        %v1393 = vpop.f32.mrf.mxu0
        %v1394 = vadd.f32 0.0, %v1393
        %v1395 = vpop.f32.mrf.mxu0
        %v1396 = vadd.f32 0.0, %v1395
        %1397 = vmatmul.bf16.gmra.mxu0 %v798
        %v1398 = vpop.f32.mrf.mxu0
        %v1399 = vadd.f32 0.0, %v1398
        %v1400 = vpop.f32.mrf.mxu0
        %v1401 = vadd.f32 0.0, %v1400
        %1402 = vmatmul.bf16.gmra.mxu0 %v800
        %v1403 = vpop.f32.mrf.mxu0
        %v1404 = vadd.f32 0.0, %v1403
        %v1405 = vpop.f32.mrf.mxu0
        %v1406 = vadd.f32 0.0, %v1405
        %1407 = vmatmul.bf16.gmra.mxu0 %v802
        %v1408 = vpop.f32.mrf.mxu0
        %v1409 = vadd.f32 0.0, %v1408
        %v1410 = vpop.f32.mrf.mxu0
        %v1411 = vadd.f32 0.0, %v1410
        %1412 = vdwg.mxu0
        %1413 = vmatpush.bf16.xpose.msra.mxu0 %v1363
        %1414 = vmatpush.bf16.xpose.msra.mxu0 %v1361
        %1415 = vmatpush.bf16.xpose.msra.mxu0 %v1359
        %1416 = vmatpush.bf16.xpose.msra.mxu0 %v1357
        %1417 = vmatpush.bf16.xpose.msra.mxu0 %v1355
        %1418 = vmatpush.bf16.xpose.msra.mxu0 %v1353
        %1419 = vmatpush.bf16.xpose.msra.mxu0 %v1351
        %1420 = vmatpush.bf16.xpose.msra.mxu0 %v1349
        %1421 = vmatmul.bf16.gmra.mxu0 %v789
        %v1422 = vpop.f32.mrf.mxu0
        %v1423 = vadd.f32 %v1374, %v1422
        %v1424 = vpop.f32.mrf.mxu0
        %v1425 = vadd.f32 %v1376, %v1424
        %1426 = vmatmul.bf16.gmra.mxu0 %v791
        %v1427 = vpop.f32.mrf.mxu0
        %v1428 = vadd.f32 %v1379, %v1427
        %v1429 = vpop.f32.mrf.mxu0
        %v1430 = vadd.f32 %v1381, %v1429
        %1431 = vmatmul.bf16.gmra.mxu0 %v793
        %v1432 = vpop.f32.mrf.mxu0
        %v1433 = vadd.f32 %v1384, %v1432
        %v1434 = vpop.f32.mrf.mxu0
        %v1435 = vadd.f32 %v1386, %v1434
        %1436 = vmatmul.bf16.gmra.mxu0 %v795
        %v1437 = vpop.f32.mrf.mxu0
        %v1438 = vadd.f32 %v1389, %v1437
        %v1439 = vpop.f32.mrf.mxu0
        %v1440 = vadd.f32 %v1391, %v1439
        %1441 = vmatmul.bf16.gmra.mxu0 %v797
        %v1442 = vpop.f32.mrf.mxu0
        %v1443 = vadd.f32 %v1394, %v1442
        %v1444 = vpop.f32.mrf.mxu0
        %v1445 = vadd.f32 %v1396, %v1444
        %1446 = vmatmul.bf16.gmra.mxu0 %v799
        %v1447 = vpop.f32.mrf.mxu0
        %v1448 = vadd.f32 %v1399, %v1447
        %v1449 = vpop.f32.mrf.mxu0
        %v1450 = vadd.f32 %v1401, %v1449
        %1451 = vmatmul.bf16.gmra.mxu0 %v801
        %v1452 = vpop.f32.mrf.mxu0
        %v1453 = vadd.f32 %v1404, %v1452
        %v1454 = vpop.f32.mrf.mxu0
        %v1455 = vadd.f32 %v1406, %v1454
        %1456 = vmatmul.bf16.gmra.mxu0 %v803
        %v1457 = vpop.f32.mrf.mxu0
        %v1458 = vadd.f32 %v1409, %v1457
        %v1459 = vpop.f32.mrf.mxu0
        %v1460 = vadd.f32 %v1411, %v1459
        %1461 = vdwg.mxu0
        %v1462 = vld [vmem:[%s6] sm:$0xff]
        %v1463 = vld [vmem:[%s6 + $0x8] sm:$0xff]
        %v1464 = vld [vmem:[%s6 + $0x10] sm:$0xff]
        %v1465 = vld [vmem:[%s6 + $0x18] sm:$0xff]
        %v1466 = vld [vmem:[%s6 + $0x20] sm:$0xff]
        %v1467 = vld [vmem:[%s6 + $0x28] sm:$0xff]
        %v1468 = vld [vmem:[%s6 + $0x30] sm:$0xff]
        %v1469 = vld [vmem:[%s6 + $0x38] sm:$0xff]
        %v1470 = vld [vmem:[%s6 + $0x40] sm:$0xff]
        %v1471 = vld [vmem:[%s6 + $0x48] sm:$0xff]
        %v1472 = vld [vmem:[%s6 + $0x50] sm:$0xff]
        %v1473 = vld [vmem:[%s6 + $0x58] sm:$0xff]
        %v1474 = vld [vmem:[%s6 + $0x60] sm:$0xff]
        %v1475 = vld [vmem:[%s6 + $0x68] sm:$0xff]
        %v1476 = vld [vmem:[%s6 + $0x70] sm:$0xff]
        %v1477 = vld [vmem:[%s6 + $0x78] sm:$0xff]
        %v1478 = vmul.f32 %v1423, %v1462
        %v1479 = vmul.f32 %v1425, %v1463
        %v1480 = vmul.f32 %v1428, %v1464
        %v1481 = vmul.f32 %v1430, %v1465
        %v1482 = vmul.f32 %v1433, %v1466
        %v1483 = vmul.f32 %v1435, %v1467
        %v1484 = vmul.f32 %v1438, %v1468
        %v1485 = vmul.f32 %v1440, %v1469
        %v1486 = vmul.f32 %v1443, %v1470
        %v1487 = vmul.f32 %v1445, %v1471
        %v1488 = vmul.f32 %v1448, %v1472
        %v1489 = vmul.f32 %v1450, %v1473
        %v1490 = vmul.f32 %v1453, %v1474
        %v1491 = vmul.f32 %v1455, %v1475
        %v1492 = vmul.f32 %v1458, %v1476
        %v1493 = vmul.f32 %v1460, %v1477
        %v1494 = vpack.c.bf16 %v1479, %v1478
        %v1495 = vpack.c.bf16 %v1481, %v1480
        %v1496 = vpack.c.bf16 %v1483, %v1482
        %v1497 = vpack.c.bf16 %v1485, %v1484
        %v1498 = vpack.c.bf16 %v1487, %v1486
        %v1499 = vpack.c.bf16 %v1489, %v1488
        %v1500 = vpack.c.bf16 %v1491, %v1490
        %v1501 = vpack.c.bf16 %v1493, %v1492
        %1502 = vmatpush.bf16.msra.mxu0 %v1106
        %1503 = vmatpush.bf16.msra.mxu0 %v1104
        %1504 = vmatpush.bf16.msra.mxu0 %v1102
        %1505 = vmatpush.bf16.msra.mxu0 %v1100
        %1506 = vmatpush.bf16.msra.mxu0 %v1098
        %1507 = vmatpush.bf16.msra.mxu0 %v1096
        %1508 = vmatpush.bf16.msra.mxu0 %v1094
        %1509 = vmatpush.bf16.msra.mxu0 %v1092
        %1510 = vmatmul.bf16.gmra.mxu0 %v1494
        %v1511 = vpop.f32.mrf.mxu0
        %v1512 = vadd.f32 0.0, %v1511
        %v1513 = vpop.f32.mrf.mxu0
        %v1514 = vadd.f32 0.0, %v1513
        %1515 = vmatmul.bf16.gmra.mxu0 %v1495
        %v1516 = vpop.f32.mrf.mxu0
        %v1517 = vadd.f32 0.0, %v1516
        %v1518 = vpop.f32.mrf.mxu0
        %v1519 = vadd.f32 0.0, %v1518
        %1520 = vmatmul.bf16.gmra.mxu0 %v1496
        %v1521 = vpop.f32.mrf.mxu0
        %v1522 = vadd.f32 0.0, %v1521
        %v1523 = vpop.f32.mrf.mxu0
        %v1524 = vadd.f32 0.0, %v1523
        %1525 = vmatmul.bf16.gmra.mxu0 %v1497
        %v1526 = vpop.f32.mrf.mxu0
        %v1527 = vadd.f32 0.0, %v1526
        %v1528 = vpop.f32.mrf.mxu0
        %v1529 = vadd.f32 0.0, %v1528
        %1530 = vmatmul.bf16.gmra.mxu0 %v1498
        %v1531 = vpop.f32.mrf.mxu0
        %v1532 = vadd.f32 0.0, %v1531
        %v1533 = vpop.f32.mrf.mxu0
        %v1534 = vadd.f32 0.0, %v1533
        %1535 = vmatmul.bf16.gmra.mxu0 %v1499
        %v1536 = vpop.f32.mrf.mxu0
        %v1537 = vadd.f32 0.0, %v1536
        %v1538 = vpop.f32.mrf.mxu0
        %v1539 = vadd.f32 0.0, %v1538
        %1540 = vmatmul.bf16.gmra.mxu0 %v1500
        %v1541 = vpop.f32.mrf.mxu0
        %v1542 = vadd.f32 0.0, %v1541
        %v1543 = vpop.f32.mrf.mxu0
        %v1544 = vadd.f32 0.0, %v1543
        %1545 = vmatmul.bf16.gmra.mxu0 %v1501
        %v1546 = vpop.f32.mrf.mxu0
        %v1547 = vadd.f32 0.0, %v1546
        %v1548 = vpop.f32.mrf.mxu0
        %v1549 = vadd.f32 0.0, %v1548
        %1550 = vdwg.mxu0
        %1551 = vmatpush.bf16.msra.mxu0 %v1107
        %1552 = vmatpush.bf16.msra.mxu0 %v1105
        %1553 = vmatpush.bf16.msra.mxu0 %v1103
        %1554 = vmatpush.bf16.msra.mxu0 %v1101
        %1555 = vmatpush.bf16.msra.mxu0 %v1099
        %1556 = vmatpush.bf16.msra.mxu0 %v1097
        %1557 = vmatpush.bf16.msra.mxu0 %v1095
        %1558 = vmatpush.bf16.msra.mxu0 %v1093
        %1559 = vmatmul.bf16.gmra.mxu0 %v1494
        %v1560 = vpop.f32.mrf.mxu0
        %v1561 = vadd.f32 0.0, %v1560
        %v1562 = vpop.f32.mrf.mxu0
        %v1563 = vadd.f32 0.0, %v1562
        %1564 = vmatmul.bf16.gmra.mxu0 %v1495
        %v1565 = vpop.f32.mrf.mxu0
        %v1566 = vadd.f32 0.0, %v1565
        %v1567 = vpop.f32.mrf.mxu0
        %v1568 = vadd.f32 0.0, %v1567
        %1569 = vmatmul.bf16.gmra.mxu0 %v1496
        %v1570 = vpop.f32.mrf.mxu0
        %v1571 = vadd.f32 0.0, %v1570
        %v1572 = vpop.f32.mrf.mxu0
        %v1573 = vadd.f32 0.0, %v1572
        %1574 = vmatmul.bf16.gmra.mxu0 %v1497
        %v1575 = vpop.f32.mrf.mxu0
        %v1576 = vadd.f32 0.0, %v1575
        %v1577 = vpop.f32.mrf.mxu0
        %v1578 = vadd.f32 0.0, %v1577
        %1579 = vmatmul.bf16.gmra.mxu0 %v1498
        %v1580 = vpop.f32.mrf.mxu0
        %v1581 = vadd.f32 0.0, %v1580
        %v1582 = vpop.f32.mrf.mxu0
        %v1583 = vadd.f32 0.0, %v1582
        %1584 = vmatmul.bf16.gmra.mxu0 %v1499
        %v1585 = vpop.f32.mrf.mxu0
        %v1586 = vadd.f32 0.0, %v1585
        %v1587 = vpop.f32.mrf.mxu0
        %v1588 = vadd.f32 0.0, %v1587
        %1589 = vmatmul.bf16.gmra.mxu0 %v1500
        %v1590 = vpop.f32.mrf.mxu0
        %v1591 = vadd.f32 0.0, %v1590
        %v1592 = vpop.f32.mrf.mxu0
        %v1593 = vadd.f32 0.0, %v1592
        %1594 = vmatmul.bf16.gmra.mxu0 %v1501
        %v1595 = vpop.f32.mrf.mxu0
        %v1596 = vadd.f32 0.0, %v1595
        %v1597 = vpop.f32.mrf.mxu0
        %v1598 = vadd.f32 0.0, %v1597
        %1599 = vdwg.mxu0
        %v1600 = vld [vmem:[%s2] sm:$0xf]
        %v1601 = vpack.c.bf16 %v1514, %v1512
        %v1602 = vpack.c.bf16 %v1563, %v1561
        %v1603 = vpack.c.bf16 %v1519, %v1517
        %v1604 = vpack.c.bf16 %v1568, %v1566
        %v1605 = vpack.c.bf16 %v1524, %v1522
        %v1606 = vpack.c.bf16 %v1573, %v1571
        %v1607 = vpack.c.bf16 %v1529, %v1527
        %v1608 = vpack.c.bf16 %v1578, %v1576
        %v1609 = vpack.c.bf16 %v1534, %v1532
        %v1610 = vpack.c.bf16 %v1583, %v1581
        %v1611 = vpack.c.bf16 %v1539, %v1537
        %v1612 = vpack.c.bf16 %v1588, %v1586
        %v1613 = vpack.c.bf16 %v1544, %v1542
        %v1614 = vpack.c.bf16 %v1593, %v1591
        %v1615 = vpack.c.bf16 %v1549, %v1547
        %v1616 = vpack.c.bf16 %v1598, %v1596
        %v1617 = vld [vmem:[%s3] sm:$0xff]
        %1619 = vset.pattern.permute.xlu0 0
        %1620 = vperm.xlu0 %1619, %v1617
        %v1621 = vpop.permute.xlu0 %1620
        %1623 = vmatpush.bf16.msra.mxu0 %v1615
        %1624 = vmatpush.bf16.msra.mxu0 %v1613
        %1625 = vmatpush.bf16.msra.mxu0 %v1611
        %1626 = vmatpush.bf16.msra.mxu0 %v1609
        %1627 = vmatpush.bf16.msra.mxu0 %v1607
        %1628 = vmatpush.bf16.msra.mxu0 %v1605
        %1629 = vmatpush.bf16.msra.mxu0 %v1603
        %1630 = vmatpush.bf16.msra.mxu0 %v1601
        %1631 = vmatmul.bf16.gmra.mxu0 %v1600
        %v1632 = vpop.f32.mrf.mxu0
        %v1633 = vadd.f32 %v1621, %v1632
        %v1634 = vpop.f32.mrf.mxu0
        %1635 = vdwg.mxu0
        %1636 = vmatpush.bf16.msra.mxu0 %v1616
        %1637 = vmatpush.bf16.msra.mxu0 %v1614
        %1638 = vmatpush.bf16.msra.mxu0 %v1612
        %1639 = vmatpush.bf16.msra.mxu0 %v1610
        %1640 = vmatpush.bf16.msra.mxu0 %v1608
        %1641 = vmatpush.bf16.msra.mxu0 %v1606
        %1642 = vmatpush.bf16.msra.mxu0 %v1604
        %1643 = vmatpush.bf16.msra.mxu0 %v1602
        %1644 = vmatmul.bf16.gmra.mxu0 %v1600
        %v1645 = vpop.f32.mrf.mxu0
        %v1646 = vadd.f32 %v1621, %v1645
        %v1647 = vpop.f32.mrf.mxu0
        %1648 = vdwg.mxu0
        %v1649 = vadd.f32 %v1633, %v1646
        %1650 = vadd.xlane.f32.xlu0 %v1649
        %v1651 = vpop.xlane.xlu0 %1650
        %v1652 = vrot.slane %v1651, 4
        %v1653 = vadd.f32 %v1651, %v1652
        %v1654 = vrot.slane %v1653, 2
        %v1655 = vadd.f32 %v1653, %v1654
        %v1656 = vrot.slane %v1655, 1
        %v1657 = vadd.f32 %v1655, %v1656
        %s1658 = vtos %v1657
        %v1659 = vstv %s1658
        %v1660 = vmul.f32 %v1659, 0.00048828125
        %v1661 = vsub.f32 %v1633, %v1660
        %v1662 = vsub.f32 %v1646, %v1660
        %v1663 = vmul.f32 %v1661, %v1661
        %v1664 = vmul.f32 %v1662, %v1662
        %v1665 = vadd.f32 %v1663, %v1664
        %1666 = vadd.xlane.f32.xlu0 %v1665
        %v1667 = vpop.xlane.xlu0 %1666
        %v1668 = vrot.slane %v1667, 4
        %v1669 = vadd.f32 %v1667, %v1668
        %v1670 = vrot.slane %v1669, 2
        %v1671 = vadd.f32 %v1669, %v1670
        %v1672 = vrot.slane %v1671, 1
        %v1673 = vadd.f32 %v1671, %v1672
        %s1674 = vtos %v1673
        %v1675 = vstv %s1674
        %v1676 = vmul.f32 %v1675, 0.00048828125
        %v1677 = vadd.f32 %v1676, 1e-05
        %v1678 = vrsqrt.pop %v1677
        %v1679 = vmul.f32 %v1678, %v1677
        %v1680 = vmul.f32 %v1679, %v1678
        %v1681 = vmul.f32 0.5, %v1680
        %v1682 = vsub.f32 1.5, %v1681
        %v1683 = vmul.f32 %v1678, %v1682
        %vm1684 = vweird.f32 %v1677
        %vm1685 = vweird.f32 %v1678
        %vm1686 = vmor %vm1684, %vm1685
        %v1687 = vsel %vm1686, %v1678, %v1683
        %v1688 = vmul.f32 %v1661, %v1687
        %v1689 = vmul.f32 %v1662, %v1687
        %v1690 = vld [vmem:[%s4] sm:$0xff]
        %1692 = vset.pattern.permute.xlu0 0
        %1693 = vperm.xlu0 %1692, %v1690
        %v1694 = vpop.permute.xlu0 %1693
        %v1696 = vmul.f32 %v1688, %v1694
        %v1697 = vmul.f32 %v1689, %v1694
        %v1698 = vld [vmem:[%s5] sm:$0xff]
        %1700 = vset.pattern.permute.xlu0 0
        %1701 = vperm.xlu0 %1700, %v1698
        %v1702 = vpop.permute.xlu0 %1701
        %v1704 = vadd.f32 %v1696, %v1702
        %v1705 = vadd.f32 %v1697, %v1702
        %1706 = vst [vmem:[%s271] sm:$0xff] %v1704
        %1707 = vst [vmem:[%s271 + $0x8] sm:$0xff] %v1705
        %s1708 = sand.u32 %s181, 1
        %s1709 = scalar_lea.sflag [#allocation3], %s1708
        %s1710 = sand.u32 %s181, 1
        %s1711 = smul.addr %s1710, 16
        %s1712 = scalar_lea.vmem [#allocation2], %s1711
        // Predicated region
        $region49: #{tpu_custom_call.1} parent=47 // pred_check
          %p1713 = pneg %p191
        $region50: #{tpu_custom_call.1} parent=47 // pred_check_branch
          %1715 = sbr.rel (%p1713) target = $region52
        $region51: #{tpu_custom_call.1} parent=47 // pred_region
          %1717 = vsyncadd %s1709, 0
          %s1718 = smul.addr %s21, 2
          %s1719 = smul.addr %s1718, 8
          %s1720 = scalar_lea.hbm %s7, %s1719
          %s1722 = sshll.u32 %s1712, 4
          %s1723 = int_to_ptr.vmem [resolvable:$true] %s1722
          %s1724 = sshll.u32 %s1720, 4
          %s1725 = int_to_ptr.hbm [resolvable:$true] %s1724
          %1727 = dma.vmem_to_hbm [thread:$0]  %s1723, 256, %s1725, %s1709
        $region52: #{tpu_custom_call.1} parent=47 // pred_fallthru
          _
      $region48: #{tpu_custom_call.1} parent=5 // pred_fallthru
        _
      %p1728 = scmp.le.s32.totalorder 2, %s16
      // Predicated region
      $region53: #{tpu_custom_call.1} parent=5 // pred_check
        %p1729 = pneg %p1728
      $region54: #{tpu_custom_call.1} parent=5 // pred_check_branch
        %1731 = sbr.rel (%p1729) target = $region56
      $region55: #{tpu_custom_call.1} parent=5 // pred_region
        %s1732 = ssub.s32 %s16, 2
        // Predicated region
        $region57: #{tpu_custom_call.1} parent=55 // pred_check
          %p1733 = pneg %p197
        $region58: #{tpu_custom_call.1} parent=55 // pred_check_branch
          %1735 = sbr.rel (%p1733) target = $region60
        $region59: #{tpu_custom_call.1} parent=55 // pred_region
          %s1736 = sand.u32 %s182, 1
          %s1737 = scalar_lea.sflag [#allocation3], %s1736
          %s1738 = sand.u32 %s182, 1
          %s1739 = smul.addr %s1738, 16
          %s1740 = scalar_lea.vmem [#allocation2], %s1739
          %1742 = dma.done %s1737, 256
        $region60: #{tpu_custom_call.1} parent=55 // pred_fallthru
          _
      $region56: #{tpu_custom_call.1} parent=5 // pred_fallthru
        _
    $region6: #{tpu_custom_call.1} parent=1 // loop_footer
      %s20 = sadd.s32 1, %s16
    $region7: #{tpu_custom_call.1} parent=1 // loop_footer_branch
      %15 = sbr.rel target = $region3
    $region8: #{tpu_custom_call.1} parent=1 // loop_exit
      _
    %1743 = vsyncpa [#allocation3], 1
    %s1744 = scalar_lea.sflag [#allocation3], 1
    %1745 = vsyncpa %s1744, 1

</llo_original>
